<compile_context>
chip_gen: v6e
topology: v6e:2x2x1
jax: 0.10.0
libtpu: 0.0.40
codegen_flags: <defaults>
</compile_context>

<pallas_src>
import jax
import jax.numpy as jnp
import numpy as np
from jax.experimental import pallas as pl
from jax.experimental.pallas import tpu as pltpu


def _attn_feat_trans_kernel(xs_ref, a1c_ref, a2c_ref, w_ref, o_ref):
    Tb, M, C, F = xs_ref.shape          # M = N + 1 (self + neighbors)
    CF = C * F
    OOp = w_ref.shape[1]                # 128-padded Oc*Of

    xs = xs_ref[...]                    # (Tb, M, C, F) f32, stacked [x ; neighbors]
    a1c = a1c_ref[...]                  # (1, F)  colsum(att1_w)
    a2c = a2c_ref[...]                  # (1, F)  colsum(att2_w)

    x3 = xs[:, 0]                       # (Tb, C, F)   self features
    y4 = xs[:, 1:]                      # (Tb, N, C, F) neighbor features

    # ---- attention scalar weights (exact colsum factorization of the reference) ----
    # w[t, n] = [sum_{c,j}(x[t] @ att1^T)] * [sum_{k,l}(y[t,n] @ att2^T)]
    s1 = jnp.sum(jnp.sum(x3 * a1c[:, None, :], axis=2), axis=1, keepdims=True)   # (Tb, 1)
    wy = jnp.sum(jnp.sum(y4 * a2c[:, None, None, :], axis=3), axis=2)            # (Tb, N)
    wn = s1 * wy                                                                  # (Tb, N)

    # ---- weighted neighbor aggregate: yw[t,c,f] = sum_n wn[t,n] * y[t,n,c,f] ------
    yw = jnp.sum(wn[:, :, None, None] * y4, axis=1)                               # (Tb, C, F)

    # ---- symmetric per-channel feature adjacency --------------------------------
    # sym[t,c,a,b] = x[t,c,a]*yw[t,c,b] + yw[t,c,a]*x[t,c,b]
    sym = x3[:, :, :, None] * yw[:, :, None, :] + yw[:, :, :, None] * x3[:, :, None, :]
    # sgnroot: sign(s)*sqrt(clamp(|s|,1e-8)) == s * rsqrt(max(|s|,1e-8)) for |s|>=1e-8
    sg = sym * jax.lax.rsqrt(jnp.maximum(jnp.abs(sym), 1e-8))                     # EUP
    den = jnp.sum(jnp.abs(sg), axis=1, keepdims=True) + 1e-7                      # (Tb,1,F,F)
    adj = sg * pl.reciprocal(den, approx=True)                                    # (Tb,C,F,F)
    # NOTE: reference's isnan->0 guard dropped: den >= 1e-7, so adj is finite
    # whenever the inputs are finite.

    # ---- z = adj @ x, per channel (dense batched MXU matmuls, bf16 operands) -----
    # z[t,m,c,a] = sum_b adj[t,c,a,b] * xs[t,m,c,b]
    z_parts = []
    for c in range(C):                                   # C is small & static
        xc = xs[:, :, c, :].astype(jnp.bfloat16)         # (Tb, M, F)
        ac = adj[:, c].astype(jnp.bfloat16)              # (Tb, F, F)
        zc = jnp.einsum('tmb,tab->tma', xc, ac,
                        preferred_element_type=jnp.float32)   # (Tb, M, F)
        z_parts.append(zc)
    z = jnp.concatenate(z_parts, axis=2)                 # (Tb, M, C*F), k = c*F + a

    # ---- full-width Conv1d == one dense matmul with the flattened conv weight ----
    out = jnp.dot(z.reshape(Tb * M, CF).astype(jnp.bfloat16), w_ref[...],
                  preferred_element_type=jnp.float32)    # (Tb*M, OOp) lane-dense

    # single lane-dense store per grid step
    o_ref[...] = out.reshape(Tb, M, OOp).astype(o_ref.dtype)


def attn_feat_trans1d(x, neighbor, att1_w, att2_w, conv_w,
                      out_channels, out_features, *, block_batch=None):
    B, C, F = x.shape
    Bn, N, Cn, Fn = neighbor.shape
    assert (Bn, Cn, Fn) == (B, C, F)
    Oc, Of = out_channels, out_features
    OO = Oc * Of
    CF = C * F
    M = N + 1
    LANE = 128
    OOp = ((OO + LANE - 1) // LANE) * LANE               # lane-dense padded output width

    # ---- batch blocking: target ~256 matmul rows per step (tb*M) for the MXU,
    # but never over-block a tiny batch; handle any B via cdiv + zero padding and
    # keep an even number of parallel steps (v7x has 2 TensorCores).
    if block_batch is None:
        block_batch = max(1, -(-256 // M))               # ceil(256 / M)
    tb = max(1, min(block_batch, -(-B // 2)))            # >= 2 steps when B allows
    steps = -(-B // tb)                                  # cdiv
    if steps > 1 and steps % 2 == 1:
        steps += 1
    Bp = steps * tb

    # ---- stacked [self ; neighbors] operand (one-time, wrapper-side) -------------
    xs = jnp.concatenate([x[:, None], neighbor], axis=1).astype(jnp.float32)  # (B,M,C,F)
    if Bp != B:
        xs = jnp.pad(xs, ((0, Bp - B), (0, 0), (0, 0), (0, 0)))   # zero rows -> zero outputs

    # ---- parameter-only preprocessing (cheap, one-time) --------------------------
    a1c = jnp.sum(att1_w, axis=0).reshape(1, F).astype(jnp.float32)   # colsum(att1)
    a2c = jnp.sum(att2_w, axis=0).reshape(1, F).astype(jnp.float32)   # colsum(att2)
    w2d = jnp.transpose(conv_w.reshape(OO, CF))                       # (C*F, Oc*Of)
    w2d = jnp.pad(w2d, ((0, 0), (0, OOp - OO))).astype(jnp.bfloat16)  # (C*F, 128)

    out = pl.pallas_call(
        _attn_feat_trans_kernel,
        out_shape=jax.ShapeDtypeStruct((Bp, M, OOp), jnp.float32),
        grid_spec=pltpu.PrefetchScalarGridSpec(
            num_scalar_prefetch=0,
            grid=(steps,),
            in_specs=[
                pl.BlockSpec((tb, M, C, F), lambda b: (b, 0, 0, 0)),
                pl.BlockSpec((1, F), lambda b: (0, 0)),        # resident (const index map)
                pl.BlockSpec((1, F), lambda b: (0, 0)),        # resident
                pl.BlockSpec((CF, OOp), lambda b: (0, 0)),     # resident conv weight
            ],
            out_specs=pl.BlockSpec((tb, M, OOp), lambda b: (b, 0, 0)),
        ),
        compiler_params=pltpu.CompilerParams(
            dimension_semantics=("parallel",),
            vmem_limit_bytes=32 * 1024 * 1024,
        ),
    )(xs, a1c, a2c, w2d)

    out = out[:B, :, :OO]                                # drop batch + lane padding
    x_out = out[:, 0].reshape(B, Oc, Of)
    n_out = out[:, 1:].reshape(B, N, Oc, Of)
    return x_out, n_out


def reference(x, y, a1, a2, conv_w, Oc, Of):
    """Pure-JAX mirror of the PyTorch forward (for correctness checking)."""
    B, C, F = x.shape
    N = y.shape[1]
    with jax.default_matmul_precision("highest"):
        adjs = []
        for i in range(B):
            att1x = jnp.einsum("cf,jf->cj", x[i], a1)
            att2y = jnp.einsum("ncf,jf->ncj", y[i], a2)
            w = jnp.einsum("ci,nkl->n", att1x, att2y)
            adjs.append(jnp.einsum("ca,ncb,n->cab", x[i], y[i], w))
        fadj = jnp.stack(adjs)                                 # (B,C,F,F)
        fadj = fadj + jnp.swapaxes(fadj, -1, -2)
        sg = jnp.sign(fadj) * jnp.sqrt(jnp.maximum(jnp.abs(fadj), 1e-8))
        adj = sg / (jnp.sum(jnp.abs(sg), axis=1, keepdims=True) + 1e-7)
        adj = jnp.where(jnp.isnan(adj), 0.0, adj)

        z = jnp.einsum("bcij,bcj->bci", adj, x)
        out_x = jnp.einsum("ocf,bcf->bo", conv_w, z).reshape(B, Oc, Of)

        outs = []
        for i in range(B):
            zn = jnp.einsum("cij,ncj->nci", adj[i], y[i])
            outs.append(jnp.einsum("ocf,ncf->no", conv_w, zn).reshape(N, Oc, Of))
        out_n = jnp.stack(outs)
    return out_x, out_n


if __name__ == "__main__":
    # Small shapes consistent with the module.
    B, C, F = 8, 4, 16          # batch, in_channels, in_features
    Oc, Of = 3, 8               # out_channels, out_features
    N = 5                       # neighbors per sample (fixed / stacked)

    key = jax.random.PRNGKey(0)
    k1, k2, k3, k4, k5 = jax.random.split(key, 5)

    x = jax.random.normal(k1, (B, C, F), dtype=jnp.float32)
    neighbor = jax.random.normal(k2, (B, N, C, F), dtype=jnp.float32)

    # Deterministic parameter init (PyTorch-default-like uniform ranges).
    kf = 1.0 / np.sqrt(F)
    kcf = 1.0 / np.sqrt(C * F)
    att1_w = jax.random.uniform(k3, (C, F), jnp.float32, -kf, kf)
    att2_w = jax.random.uniform(k4, (C, F), jnp.float32, -kf, kf)
    conv_w = jax.random.uniform(k5, (Oc * Of, C, F), jnp.float32, -kcf, kcf)

    x_out, n_out = attn_feat_trans1d(x, neighbor, att1_w, att2_w, conv_w, Oc, Of)
    jax.block_until_ready((x_out, n_out))

    ref_x, ref_n = reference(x, neighbor, att1_w, att2_w, conv_w, Oc, Of)
    # bf16 MXU operands (f32 accumulation) -> slightly looser tolerance than pure f32.
    np.testing.assert_allclose(np.asarray(x_out), np.asarray(ref_x), rtol=1e-2, atol=1e-2)
    np.testing.assert_allclose(np.asarray(n_out), np.asarray(ref_n), rtol=1e-2, atol=1e-2)

    print("KERNEL_OK")
</pallas_src>

<mosaic_0001>
module attributes {stable_mosaic.version = 11 : i64} {
  func.func @_attn_feat_trans_kernel(%arg0: i32, %arg1: memref<4x6x4x16xf32, #tpu.memory_space<vmem>>, %arg2: memref<1x16xf32, #tpu.memory_space<vmem>>, %arg3: memref<1x16xf32, #tpu.memory_space<vmem>>, %arg4: memref<64x128xbf16, #tpu.memory_space<vmem>>, %arg5: memref<4x6x128xf32, #tpu.memory_space<vmem>>) attributes {dimension_semantics = [#tpu.dimension_semantics<parallel>], iteration_bounds = array<i64: 2>, scalar_prefetch = 0 : i64, scratch_operands = 0 : i64, tpu.core_type = #tpu.core_type<tc>, window_params = [{transform_indices = @transform_0, window_bounds = array<i64: 4, 6, 4, 16>}, {pipeline_mode = #tpu.pipeline_mode<synchronous>, transform_indices = @transform_1, window_bounds = array<i64: 1, 16>}, {pipeline_mode = #tpu.pipeline_mode<synchronous>, transform_indices = @transform_2, window_bounds = array<i64: 1, 16>}, {pipeline_mode = #tpu.pipeline_mode<synchronous>, transform_indices = @transform_3, window_bounds = array<i64: 64, 128>}, {transform_indices = @transform_4, window_bounds = array<i64: 4, 6, 128>}]} {
    %c0 = arith.constant 0 : index
    %c0_0 = arith.constant 0 : index
    %c0_1 = arith.constant 0 : index
    %c0_2 = arith.constant 0 : index
    %0 = vector.load %arg1[%c0, %c0_0, %c0_1, %c0_2] : memref<4x6x4x16xf32, #tpu.memory_space<vmem>>, vector<4x6x4x16xf32>
    %c0_3 = arith.constant 0 : index
    %c0_4 = arith.constant 0 : index
    %1 = vector.load %arg2[%c0_3, %c0_4] : memref<1x16xf32, #tpu.memory_space<vmem>>, vector<1x16xf32>
    %c0_5 = arith.constant 0 : index
    %c0_6 = arith.constant 0 : index
    %2 = vector.load %arg3[%c0_5, %c0_6] : memref<1x16xf32, #tpu.memory_space<vmem>>, vector<1x16xf32>
    %3 = vector.extract_strided_slice %0 {offsets = [0, 0, 0, 0], sizes = [4, 1, 4, 16], strides = [1, 1, 1, 1]} : vector<4x6x4x16xf32> to vector<4x1x4x16xf32>
    %4 = vector.shape_cast %3 : vector<4x1x4x16xf32> to vector<4x4x16xf32>
    %5 = vector.extract_strided_slice %0 {offsets = [0, 1, 0, 0], sizes = [4, 5, 4, 16], strides = [1, 1, 1, 1]} : vector<4x6x4x16xf32> to vector<4x5x4x16xf32>
    %6 = vector.shape_cast %1 : vector<1x16xf32> to vector<1x1x16xf32>
    %7 = vector.broadcast %6 : vector<1x1x16xf32> to vector<4x4x16xf32>
    %8 = arith.mulf %4, %7 : vector<4x4x16xf32>
    %cst = arith.constant dense<0.000000e+00> : vector<4x4xf32>
    %9 = vector.multi_reduction <add>, %8, %cst [2] : vector<4x4x16xf32> to vector<4x4xf32>
    %cst_7 = arith.constant dense<0.000000e+00> : vector<4xf32>
    %10 = vector.multi_reduction <add>, %9, %cst_7 [1] : vector<4x4xf32> to vector<4xf32>
    %11 = vector.shape_cast %10 : vector<4xf32> to vector<4x1xf32>
    %12 = vector.shape_cast %2 : vector<1x16xf32> to vector<1x1x1x16xf32>
    %13 = vector.broadcast %12 : vector<1x1x1x16xf32> to vector<4x5x4x16xf32>
    %14 = arith.mulf %5, %13 : vector<4x5x4x16xf32>
    %cst_8 = arith.constant dense<0.000000e+00> : vector<4x5x4xf32>
    %15 = vector.multi_reduction <add>, %14, %cst_8 [3] : vector<4x5x4x16xf32> to vector<4x5x4xf32>
    %cst_9 = arith.constant dense<0.000000e+00> : vector<4x5xf32>
    %16 = vector.multi_reduction <add>, %15, %cst_9 [2] : vector<4x5x4xf32> to vector<4x5xf32>
    %17 = vector.broadcast %11 : vector<4x1xf32> to vector<4x5xf32>
    %18 = arith.mulf %17, %16 : vector<4x5xf32>
    %19 = vector.shape_cast %18 : vector<4x5xf32> to vector<4x5x1x1xf32>
    %20 = vector.broadcast %19 : vector<4x5x1x1xf32> to vector<4x5x4x16xf32>
    %21 = arith.mulf %20, %5 : vector<4x5x4x16xf32>
    %cst_10 = arith.constant dense<0.000000e+00> : vector<4x4x16xf32>
    %22 = vector.multi_reduction <add>, %21, %cst_10 [1] : vector<4x5x4x16xf32> to vector<4x4x16xf32>
    %23 = vector.shape_cast %4 : vector<4x4x16xf32> to vector<4x4x16x1xf32>
    %24 = vector.shape_cast %22 : vector<4x4x16xf32> to vector<4x4x1x16xf32>
    %25 = vector.broadcast %23 : vector<4x4x16x1xf32> to vector<4x4x16x16xf32>
    %26 = vector.broadcast %24 : vector<4x4x1x16xf32> to vector<4x4x16x16xf32>
    %27 = arith.mulf %25, %26 : vector<4x4x16x16xf32>
    %28 = vector.shape_cast %22 : vector<4x4x16xf32> to vector<4x4x16x1xf32>
    %29 = vector.shape_cast %4 : vector<4x4x16xf32> to vector<4x4x1x16xf32>
    %30 = vector.broadcast %28 : vector<4x4x16x1xf32> to vector<4x4x16x16xf32>
    %31 = vector.broadcast %29 : vector<4x4x1x16xf32> to vector<4x4x16x16xf32>
    %32 = arith.mulf %30, %31 : vector<4x4x16x16xf32>
    %33 = arith.addf %27, %32 : vector<4x4x16x16xf32>
    %34 = math.absf %33 : vector<4x4x16x16xf32>
    %cst_11 = arith.constant 9.99999993E-9 : f32
    %35 = vector.broadcast %cst_11 : f32 to vector<4x4x16x16xf32>
    %36 = arith.maximumf %34, %35 : vector<4x4x16x16xf32>
    %37 = math.rsqrt %36 : vector<4x4x16x16xf32>
    %38 = arith.mulf %33, %37 : vector<4x4x16x16xf32>
    %39 = math.absf %38 : vector<4x4x16x16xf32>
    %cst_12 = arith.constant dense<0.000000e+00> : vector<4x16x16xf32>
    %40 = vector.multi_reduction <add>, %39, %cst_12 [1] : vector<4x4x16x16xf32> to vector<4x16x16xf32>
    %41 = vector.shape_cast %40 : vector<4x16x16xf32> to vector<4x1x16x16xf32>
    %cst_13 = arith.constant 1.000000e-07 : f32
    %42 = vector.broadcast %cst_13 : f32 to vector<4x1x16x16xf32>
    %43 = arith.addf %41, %42 : vector<4x1x16x16xf32>
    %44 = tpu.reciprocal %43 {approx = true} : vector<4x1x16x16xf32> -> vector<4x1x16x16xf32>
    %45 = vector.broadcast %44 : vector<4x1x16x16xf32> to vector<4x4x16x16xf32>
    %46 = arith.mulf %38, %45 : vector<4x4x16x16xf32>
    %47 = vector.extract_strided_slice %0 {offsets = [0, 0, 0, 0], sizes = [4, 6, 1, 16], strides = [1, 1, 1, 1]} : vector<4x6x4x16xf32> to vector<4x6x1x16xf32>
    %48 = vector.shape_cast %47 : vector<4x6x1x16xf32> to vector<4x6x16xf32>
    %49 = arith.truncf %48 : vector<4x6x16xf32> to vector<4x6x16xbf16>
    %50 = vector.extract_strided_slice %46 {offsets = [0, 0, 0, 0], sizes = [4, 1, 16, 16], strides = [1, 1, 1, 1]} : vector<4x4x16x16xf32> to vector<4x1x16x16xf32>
    %51 = vector.shape_cast %50 : vector<4x1x16x16xf32> to vector<4x16x16xf32>
    %52 = arith.truncf %51 : vector<4x16x16xf32> to vector<4x16x16xbf16>
    "tpu.trace_start"() <{level = 10 : i32, message = "tmb,tab->tma"}> : () -> ()
    %cst_14 = arith.constant dense<0.000000e+00> : vector<4x6x16xf32>
    %53 = tpu.matmul %49, %52, %cst_14 {dimension_numbers = #tpu.dot_dimension_numbers<[2], [2], [1], [1], [0, 0, 0, 1, 1, 1], [0], [0]>} : vector<4x6x16xbf16>, vector<4x16x16xbf16>, vector<4x6x16xf32> -> vector<4x6x16xf32>
    "tpu.trace_stop"() : () -> ()
    %54 = vector.extract_strided_slice %0 {offsets = [0, 0, 1, 0], sizes = [4, 6, 1, 16], strides = [1, 1, 1, 1]} : vector<4x6x4x16xf32> to vector<4x6x1x16xf32>
    %55 = vector.shape_cast %54 : vector<4x6x1x16xf32> to vector<4x6x16xf32>
    %56 = arith.truncf %55 : vector<4x6x16xf32> to vector<4x6x16xbf16>
    %57 = vector.extract_strided_slice %46 {offsets = [0, 1, 0, 0], sizes = [4, 1, 16, 16], strides = [1, 1, 1, 1]} : vector<4x4x16x16xf32> to vector<4x1x16x16xf32>
    %58 = vector.shape_cast %57 : vector<4x1x16x16xf32> to vector<4x16x16xf32>
    %59 = arith.truncf %58 : vector<4x16x16xf32> to vector<4x16x16xbf16>
    "tpu.trace_start"() <{level = 10 : i32, message = "tmb,tab->tma"}> : () -> ()
    %cst_15 = arith.constant dense<0.000000e+00> : vector<4x6x16xf32>
    %60 = tpu.matmul %56, %59, %cst_15 {dimension_numbers = #tpu.dot_dimension_numbers<[2], [2], [1], [1], [0, 0, 0, 1, 1, 1], [0], [0]>} : vector<4x6x16xbf16>, vector<4x16x16xbf16>, vector<4x6x16xf32> -> vector<4x6x16xf32>
    "tpu.trace_stop"() : () -> ()
    %61 = vector.extract_strided_slice %0 {offsets = [0, 0, 2, 0], sizes = [4, 6, 1, 16], strides = [1, 1, 1, 1]} : vector<4x6x4x16xf32> to vector<4x6x1x16xf32>
    %62 = vector.shape_cast %61 : vector<4x6x1x16xf32> to vector<4x6x16xf32>
    %63 = arith.truncf %62 : vector<4x6x16xf32> to vector<4x6x16xbf16>
    %64 = vector.extract_strided_slice %46 {offsets = [0, 2, 0, 0], sizes = [4, 1, 16, 16], strides = [1, 1, 1, 1]} : vector<4x4x16x16xf32> to vector<4x1x16x16xf32>
    %65 = vector.shape_cast %64 : vector<4x1x16x16xf32> to vector<4x16x16xf32>
    %66 = arith.truncf %65 : vector<4x16x16xf32> to vector<4x16x16xbf16>
    "tpu.trace_start"() <{level = 10 : i32, message = "tmb,tab->tma"}> : () -> ()
    %cst_16 = arith.constant dense<0.000000e+00> : vector<4x6x16xf32>
    %67 = tpu.matmul %63, %66, %cst_16 {dimension_numbers = #tpu.dot_dimension_numbers<[2], [2], [1], [1], [0, 0, 0, 1, 1, 1], [0], [0]>} : vector<4x6x16xbf16>, vector<4x16x16xbf16>, vector<4x6x16xf32> -> vector<4x6x16xf32>
    "tpu.trace_stop"() : () -> ()
    %68 = vector.extract_strided_slice %0 {offsets = [0, 0, 3, 0], sizes = [4, 6, 1, 16], strides = [1, 1, 1, 1]} : vector<4x6x4x16xf32> to vector<4x6x1x16xf32>
    %69 = vector.shape_cast %68 : vector<4x6x1x16xf32> to vector<4x6x16xf32>
    %70 = arith.truncf %69 : vector<4x6x16xf32> to vector<4x6x16xbf16>
    %71 = vector.extract_strided_slice %46 {offsets = [0, 3, 0, 0], sizes = [4, 1, 16, 16], strides = [1, 1, 1, 1]} : vector<4x4x16x16xf32> to vector<4x1x16x16xf32>
    %72 = vector.shape_cast %71 : vector<4x1x16x16xf32> to vector<4x16x16xf32>
    %73 = arith.truncf %72 : vector<4x16x16xf32> to vector<4x16x16xbf16>
    "tpu.trace_start"() <{level = 10 : i32, message = "tmb,tab->tma"}> : () -> ()
    %cst_17 = arith.constant dense<0.000000e+00> : vector<4x6x16xf32>
    %74 = tpu.matmul %70, %73, %cst_17 {dimension_numbers = #tpu.dot_dimension_numbers<[2], [2], [1], [1], [0, 0, 0, 1, 1, 1], [0], [0]>} : vector<4x6x16xbf16>, vector<4x16x16xbf16>, vector<4x6x16xf32> -> vector<4x6x16xf32>
    "tpu.trace_stop"() : () -> ()
    %75 = tpu.concatenate %53, %60, %67, %74 in 2 : vector<4x6x16xf32>, vector<4x6x16xf32>, vector<4x6x16xf32>, vector<4x6x16xf32> -> vector<4x6x64xf32>
    %76 = vector.shape_cast %75 : vector<4x6x64xf32> to vector<24x64xf32>
    %77 = arith.truncf %76 : vector<24x64xf32> to vector<24x64xbf16>
    %c0_18 = arith.constant 0 : index
    %c0_19 = arith.constant 0 : index
    %78 = vector.load %arg4[%c0_18, %c0_19] : memref<64x128xbf16, #tpu.memory_space<vmem>>, vector<64x128xbf16>
    %cst_20 = arith.constant dense<0.000000e+00> : vector<24x128xf32>
    %79 = tpu.matmul %77, %78, %cst_20 {dimension_numbers = #tpu.dot_dimension_numbers<[1], [0], [0], [1], [0, 0, 1, 1], [], []>} : vector<24x64xbf16>, vector<64x128xbf16>, vector<24x128xf32> -> vector<24x128xf32>
    %80 = vector.shape_cast %79 : vector<24x128xf32> to vector<4x6x128xf32>
    %c0_21 = arith.constant 0 : index
    %c0_22 = arith.constant 0 : index
    %c0_23 = arith.constant 0 : index
    %81 = vector.load %arg5[%c0_21, %c0_22, %c0_23] : memref<4x6x128xf32, #tpu.memory_space<vmem>>, vector<4x6x128xf32>
    tpu.vector_store %arg5[%c0_21, %c0_22, %c0_23], %80 {strides = array<i32>} : memref<4x6x128xf32, #tpu.memory_space<vmem>>, vector<4x6x128xf32>,
    return
  }
  func.func @transform_0(%arg0: i32) -> (i32, i32, i32, i32) {
    %c0_i32 = arith.constant 0 : i32
    %c0_i32_0 = arith.constant 0 : i32
    %c0_i32_1 = arith.constant 0 : i32
    %c0_i32_2 = arith.constant 0 : i32
    return %arg0, %c0_i32, %c0_i32_0, %c0_i32_1 : i32, i32, i32, i32
  }
  func.func @transform_1(%arg0: i32) -> (i32, i32) {
    %c0_i32 = arith.constant 0 : i32
    %c0_i32_0 = arith.constant 0 : i32
    %c0_i32_1 = arith.constant 0 : i32
    return %c0_i32, %c0_i32_0 : i32, i32
  }
  func.func @transform_2(%arg0: i32) -> (i32, i32) {
    %c0_i32 = arith.constant 0 : i32
    %c0_i32_0 = arith.constant 0 : i32
    %c0_i32_1 = arith.constant 0 : i32
    return %c0_i32, %c0_i32_0 : i32, i32
  }
  func.func @transform_3(%arg0: i32) -> (i32, i32) {
    %c0_i32 = arith.constant 0 : i32
    %c0_i32_0 = arith.constant 0 : i32
    %c0_i32_1 = arith.constant 0 : i32
    return %c0_i32, %c0_i32_0 : i32, i32
  }
  func.func @transform_4(%arg0: i32) -> (i32, i32, i32) {
    %c0_i32 = arith.constant 0 : i32
    %c0_i32_0 = arith.constant 0 : i32
    %c0_i32_1 = arith.constant 0 : i32
    return %arg0, %c0_i32, %c0_i32_0 : i32, i32, i32
  }
}

</mosaic_0001>

<llo_original>
// kernel: tpu_custom_call.1
$region0: #{tpu_custom_call.1}
  #allocation0 [shape = 'u32[]', space=smem, size = 0x4, offset = 0x4, fixed_abs, tag = 'smem constant byte address 0x4 - core index']
  #allocation1 [shape = 'u32[144,128]{1,0:T(1,128)}', space=vmem, size = 0x12000, scoped, tag = 'internal scratch']
  %s0 = inlined_call_operand.hbm [shape: f32[8,6,4,16], index: 0, kind: input, shape index: {}]
  %s1 = inlined_call_operand.vmem [shape: f32[1,16], index: 1, kind: input, shape index: {}]
  %s2 = inlined_call_operand.vmem [shape: f32[1,16], index: 2, kind: input, shape index: {}]
  %s3 = inlined_call_operand.hbm [shape: bf16[64,128], index: 3, kind: input, shape index: {}]
  %s4 = inlined_call_operand.vmem [shape: f32[8,6,128], index: 4, kind: output, shape index: {}]
  %s5 = sld [smem:[#allocation0]]
  $region57: #{tpu_custom_call.1} parent=0
    _
  %s7 = ssub.s32 1, %s5
  %s8 = scalar_select 0, %s7, %s5
  $region1: #{tpu_custom_call.1} parent=0
    #allocation2 [shape = 'u8[98304]{0}', space=vmem, size = 0x18000, scoped, tag = 'input window, operand 0']
    #allocation3 [shape = 's32[2]{0}', space=sflag, size = 0x8, scoped, tag = 'scoped memory for tpu_custom_call.1']
    #allocation4 [shape = 'u8[16384]{0}', space=vmem, size = 0x4000, scoped, tag = 'input window, operand 3, single buffered']
    #allocation5 [shape = 's32[1]{0}', space=sflag, size = 0x4, scoped, tag = 'scoped memory for tpu_custom_call.1']
    %9 = vsyncpa [#allocation3], 0
    %s10 = scalar_lea.sflag [#allocation3], 1
    %11 = vsyncpa %s10, 0
    %12 = vsyncpa [#allocation5], 0
    loop: start=0, step=1, limit=4
    $region2: #{tpu_custom_call.1} parent=1 // loop_pre_header
      _
    $region3: #{tpu_custom_call.1} parent=1 // loop_header
      %s14 = sphi 0, %s18
      %p15 = scmp.ge.s32.totalorder %s14, 4
      %s24 = sphi 0, %s26
      %s27 = sphi 0, %s24
      %s28 = sphi 0, %s27
      %s44 = sphi 0, %s28
      %s48 = sphi 0, %s48
      %s50 = sphi 0, %s48
      %s51 = sphi 0, %s50
      %s65 = sphi 0, %s51
      %s69 = sphi 0, %s69
      %s71 = sphi 0, %s69
      %s72 = sphi 0, %s71
      %s86 = sphi 0, %s72
      %s90 = sphi 0, %s90
      %s92 = sphi 0, %s90
      %s93 = sphi 0, %s92
      %s107 = sphi 0, %s93
      %s113 = sphi 0, %s115
      %s116 = sphi 0, %s113
      %s117 = sphi 0, %s116
      %s133 = sphi 0, %s117
    $region4: #{tpu_custom_call.1} parent=1 // loop_header_branch
      %17 = sbr.rel (%p15) target = $region8
    $region5: #{tpu_custom_call.1} parent=1 // loop_body
      %s19 = ssub.s32 %s14, 1
      %s20 = ssub.s32 %s14, 2
      %s21 = sadd.s32 %s14, 1
      %s22 = ssub.s32 %s14, %s21
      %p23 = scmp.eq.s32.totalorder %s22, 0
      %s25 = sadd.s32 %s24, 1
      %s26 = scalar_select %p23, %s24, %s25
      %p29 = pneg %p23
      %p30 = scmp.eq.s32.totalorder %s14, 1
      %p31 = por %p29, %p30
      %p32 = scmp.ne.s32.totalorder %s24, %s27
      %p33 = scmp.eq.s32.totalorder %s14, 0
      %p34 = por %p32, %p33
      %p35 = scmp.ne.s32.totalorder %s24, %s27
      %p36 = scmp.eq.s32.totalorder %s19, 1
      %p37 = por %p35, %p36
      %p38 = scmp.ne.s32.totalorder %s27, %s28
      %p39 = scmp.eq.s32.totalorder %s19, 0
      %p40 = por %p38, %p39
      %p41 = scmp.ne.s32.totalorder %s27, %s28
      %p42 = scmp.eq.s32.totalorder %s20, 1
      %p43 = por %p41, %p42
      %p45 = scmp.ne.s32.totalorder %s28, %s44
      %p46 = scmp.eq.s32.totalorder %s20, 0
      %p47 = por %p45, %p46
      %s49 = sadd.s32 %s48, 1
      %p52 = scmp.eq.s32.totalorder %s14, 1
      %p53 = scmp.ne.s32.totalorder %s48, %s50
      %p54 = scmp.eq.s32.totalorder %s14, 0
      %p55 = por %p53, %p54
      %p56 = scmp.ne.s32.totalorder %s48, %s50
      %p57 = scmp.eq.s32.totalorder %s19, 1
      %p58 = por %p56, %p57
      %p59 = scmp.ne.s32.totalorder %s50, %s51
      %p60 = scmp.eq.s32.totalorder %s19, 0
      %p61 = por %p59, %p60
      %p62 = scmp.ne.s32.totalorder %s50, %s51
      %p63 = scmp.eq.s32.totalorder %s20, 1
      %p64 = por %p62, %p63
      %p66 = scmp.ne.s32.totalorder %s51, %s65
      %p67 = scmp.eq.s32.totalorder %s20, 0
      %p68 = por %p66, %p67
      %s70 = sadd.s32 %s69, 1
      %p73 = scmp.eq.s32.totalorder %s14, 1
      %p74 = scmp.ne.s32.totalorder %s69, %s71
      %p75 = scmp.eq.s32.totalorder %s14, 0
      %p76 = por %p74, %p75
      %p77 = scmp.ne.s32.totalorder %s69, %s71
      %p78 = scmp.eq.s32.totalorder %s19, 1
      %p79 = por %p77, %p78
      %p80 = scmp.ne.s32.totalorder %s71, %s72
      %p81 = scmp.eq.s32.totalorder %s19, 0
      %p82 = por %p80, %p81
      %p83 = scmp.ne.s32.totalorder %s71, %s72
      %p84 = scmp.eq.s32.totalorder %s20, 1
      %p85 = por %p83, %p84
      %p87 = scmp.ne.s32.totalorder %s72, %s86
      %p88 = scmp.eq.s32.totalorder %s20, 0
      %p89 = por %p87, %p88
      %s91 = sadd.s32 %s90, 1
      %p94 = scmp.eq.s32.totalorder %s14, 1
      %p95 = scmp.ne.s32.totalorder %s90, %s92
      %p96 = scmp.eq.s32.totalorder %s14, 0
      %p97 = por %p95, %p96
      %p98 = scmp.ne.s32.totalorder %s90, %s92
      %p99 = scmp.eq.s32.totalorder %s19, 1
      %p100 = por %p98, %p99
      %p101 = scmp.ne.s32.totalorder %s92, %s93
      %p102 = scmp.eq.s32.totalorder %s19, 0
      %p103 = por %p101, %p102
      %p104 = scmp.ne.s32.totalorder %s92, %s93
      %p105 = scmp.eq.s32.totalorder %s20, 1
      %p106 = por %p104, %p105
      %p108 = scmp.ne.s32.totalorder %s93, %s107
      %p109 = scmp.eq.s32.totalorder %s20, 0
      %p110 = por %p108, %p109
      %s111 = ssub.s32 %s14, %s21
      %p112 = scmp.eq.s32.totalorder %s111, 0
      %s114 = sadd.s32 %s113, 1
      %s115 = scalar_select %p112, %s113, %s114
      %p118 = pneg %p112
      %p119 = scmp.eq.s32.totalorder %s14, 1
      %p120 = por %p118, %p119
      %p121 = scmp.ne.s32.totalorder %s113, %s116
      %p122 = scmp.eq.s32.totalorder %s14, 0
      %p123 = por %p121, %p122
      %p124 = scmp.ne.s32.totalorder %s113, %s116
      %p125 = scmp.eq.s32.totalorder %s19, 1
      %p126 = por %p124, %p125
      %p127 = scmp.ne.s32.totalorder %s116, %s117
      %p128 = scmp.eq.s32.totalorder %s19, 0
      %p129 = por %p127, %p128
      %p130 = scmp.ne.s32.totalorder %s116, %s117
      %p131 = scmp.eq.s32.totalorder %s20, 1
      %p132 = por %p130, %p131
      %p134 = scmp.ne.s32.totalorder %s117, %s133
      %p135 = scmp.eq.s32.totalorder %s20, 0
      %p136 = por %p134, %p135
      %p137 = scmp.le.s32.totalorder 1, %s14
      %p138 = scmp.lt.s32.totalorder %s14, 3
      %p139 = pnand %p137, %p138
      %p140 = pneg %p139
      // Predicated region
      $region9: #{tpu_custom_call.1} parent=5 // pred_check
        _
      $region10: #{tpu_custom_call.1} parent=5 // pred_check_branch
        %142 = sbr.rel (%p139) target = $region12
      $region11: #{tpu_custom_call.1} parent=5 // pred_region
        %s143 = ssub.s32 %s14, 1
        // Predicated region
        $region13: #{tpu_custom_call.1} parent=11 // pred_check
          %p144 = pneg %p61
        $region14: #{tpu_custom_call.1} parent=11 // pred_check_branch
          %146 = sbr.rel (%p144) target = $region16
        $region15: #{tpu_custom_call.1} parent=11 // pred_region
          _
        $region16: #{tpu_custom_call.1} parent=11 // pred_fallthru
          _
        // Predicated region
        $region17: #{tpu_custom_call.1} parent=11 // pred_check
          %p147 = pneg %p82
        $region18: #{tpu_custom_call.1} parent=11 // pred_check_branch
          %149 = sbr.rel (%p147) target = $region20
        $region19: #{tpu_custom_call.1} parent=11 // pred_region
          _
        $region20: #{tpu_custom_call.1} parent=11 // pred_fallthru
          _
        // Predicated region
        $region21: #{tpu_custom_call.1} parent=11 // pred_check
          %p150 = pneg %p103
        $region22: #{tpu_custom_call.1} parent=11 // pred_check_branch
          %152 = sbr.rel (%p150) target = $region24
        $region23: #{tpu_custom_call.1} parent=11 // pred_region
          %s154 = ssub.s32 512, 512
          %155 = vsyncadd [#allocation5], %s154
          %s156 = sshll.u32 [#allocation4], 4
          %s157 = int_to_ptr.vmem [resolvable:$true] %s156
          %162 = dma.hbm_to_vmem [thread:$0]  %s3, 512, %s157, [#allocation5], 64, 64, 4
        $region24: #{tpu_custom_call.1} parent=11 // pred_fallthru
          _
      $region12: #{tpu_custom_call.1} parent=5 // pred_fallthru
        _
      %p163 = scmp.lt.s32.totalorder %s14, 2
      // Predicated region
      $region25: #{tpu_custom_call.1} parent=5 // pred_check
        %p164 = pneg %p163
      $region26: #{tpu_custom_call.1} parent=5 // pred_check_branch
        %166 = sbr.rel (%p164) target = $region28
      $region27: #{tpu_custom_call.1} parent=5 // pred_region
        // Predicated region
        $region29: #{tpu_custom_call.1} parent=27 // pred_check
          %p167 = pneg %p34
        $region30: #{tpu_custom_call.1} parent=27 // pred_check_branch
          %169 = sbr.rel (%p167) target = $region32
        $region31: #{tpu_custom_call.1} parent=27 // pred_region
          %s170 = sand.u32 %s24, 1
          %s171 = scalar_lea.sflag [#allocation3], %s170
          %s172 = sand.u32 %s24, 1
          %s173 = smul.addr %s172, 96
          %s174 = scalar_lea.vmem [#allocation2], %s173
          %s175 = smul.u32 4, %s14
          %s177 = ssub.s32 1536, 1536
          %178 = vsyncadd %s171, %s177
          %s179 = smul.addr %s175, 6
          %s180 = smul.addr %s179, 64
          %s181 = scalar_lea.hbm %s0, %s180
          %s182 = sshll.u32 %s174, 4
          %s183 = int_to_ptr.vmem [resolvable:$true] %s182
          %188 = dma.hbm_to_vmem [thread:$0]  %s181, 1536, %s183, %s171, 64, 64, 4
        $region32: #{tpu_custom_call.1} parent=27 // pred_fallthru
          _
      $region28: #{tpu_custom_call.1} parent=5 // pred_fallthru
        _
      %p189 = scmp.le.s32.totalorder 1, %s14
      %p190 = scmp.lt.s32.totalorder %s14, 3
      %p191 = pnand %p189, %p190
      %p192 = pneg %p191
      // Predicated region
      $region33: #{tpu_custom_call.1} parent=5 // pred_check
        _
      $region34: #{tpu_custom_call.1} parent=5 // pred_check_branch
        %194 = sbr.rel (%p191) target = $region36
      $region35: #{tpu_custom_call.1} parent=5 // pred_region
        %s195 = ssub.s32 %s14, 1
        %s196 = sand.u32 %s27, 1
        %s197 = scalar_lea.sflag [#allocation3], %s196
        %s198 = sand.u32 %s27, 1
        %s199 = smul.addr %s198, 96
        %s200 = scalar_lea.vmem [#allocation2], %s199
        // Predicated region
        $region37: #{tpu_custom_call.1} parent=35 // pred_check
          %p201 = pneg %p40
        $region38: #{tpu_custom_call.1} parent=35 // pred_check_branch
          %203 = sbr.rel (%p201) target = $region40
        $region39: #{tpu_custom_call.1} parent=35 // pred_region
          %204 = dma.done %s197, 1536
        $region40: #{tpu_custom_call.1} parent=35 // pred_fallthru
          _
        // Predicated region
        $region41: #{tpu_custom_call.1} parent=35 // pred_check
          %p205 = pneg %p103
        $region42: #{tpu_custom_call.1} parent=35 // pred_check_branch
          %207 = sbr.rel (%p205) target = $region44
        $region43: #{tpu_custom_call.1} parent=35 // pred_region
          %208 = dma.done [#allocation5], 512
        $region44: #{tpu_custom_call.1} parent=35 // pred_fallthru
          _
        %s209 = sand.u32 %s27, 1
        %s210 = scalar_lea.sflag [#allocation3], %s209
        %s211 = sand.u32 %s27, 1
        %s212 = smul.addr %s211, 96
        %s213 = scalar_lea.vmem [#allocation2], %s212
        %p214 = pneg %p40
        %p215 = pneg %p37
        %p216 = pneg %p61
        %p217 = pneg %p58
        %p218 = pneg %p82
        %p219 = pneg %p79
        %p220 = pneg %p103
        %p221 = pneg %p100
        %p222 = pneg %p129
        %p223 = pneg %p126
        %s224 = smul.u32 4, %s19
        %p225 = scmp.lt.s32.totalorder %s224, 7
        %s226 = scalar_select %p225, %s224, 7
        %s227 = smul.addr %s226, 8
        %s228 = scalar_lea.vmem %s4, %s227
        %s229 = smul.u32 4, %s19
        %s230 = smul.u32 4, %s19
        %p231 = scmp.lt.s32.totalorder %s230, 7
        %s232 = scalar_select %p231, %s230, 7
        %s233 = smul.addr %s232, 8
        %s234 = scalar_lea.vmem %s4, %s233
        %s235 = smul.u32 4, %s19
        %v237 = vld [vmem:[%s200] sm:$0xf]
        %v238 = vld [vmem:[%s200 + $0x4] sm:$0xf]
        %v239 = vld [vmem:[%s200 + $0x8] sm:$0xf]
        %v240 = vld [vmem:[%s200 + $0xc] sm:$0xf]
        %v241 = vld [vmem:[%s200 + $0x10] sm:$0xf]
        %v242 = vld [vmem:[%s200 + $0x14] sm:$0xf]
        %v243 = vld [vmem:[%s200 + $0x18] sm:$0xf]
        %v244 = vld [vmem:[%s200 + $0x1c] sm:$0xf]
        %v245 = vld [vmem:[%s200 + $0x20] sm:$0xf]
        %v246 = vld [vmem:[%s200 + $0x24] sm:$0xf]
        %v247 = vld [vmem:[%s200 + $0x28] sm:$0xf]
        %v248 = vld [vmem:[%s200 + $0x2c] sm:$0xf]
        %v249 = vld [vmem:[%s200 + $0x30] sm:$0xf]
        %v250 = vld [vmem:[%s200 + $0x34] sm:$0xf]
        %v251 = vld [vmem:[%s200 + $0x38] sm:$0xf]
        %v252 = vld [vmem:[%s200 + $0x3c] sm:$0xf]
        %v253 = vld [vmem:[%s200 + $0x40] sm:$0xf]
        %v254 = vld [vmem:[%s200 + $0x44] sm:$0xf]
        %v255 = vld [vmem:[%s200 + $0x48] sm:$0xf]
        %v256 = vld [vmem:[%s200 + $0x4c] sm:$0xf]
        %v257 = vld [vmem:[%s200 + $0x50] sm:$0xf]
        %v258 = vld [vmem:[%s200 + $0x54] sm:$0xf]
        %v259 = vld [vmem:[%s200 + $0x58] sm:$0xf]
        %v260 = vld [vmem:[%s200 + $0x5c] sm:$0xf]
        %v261 = vld [vmem:[%s1] sm:$0x1]
        %v262 = vld [vmem:[%s2] sm:$0x1]
        %v264 = vlaneseq
        %v265 = vshrl.u32 %v264, 7
        %v266 = vsub.s32 0, %v265
        %v267 = vrot.slane %v261, %v266
        %v269 = vmul.f32 %v237, %v267
        %v270 = vmul.f32 %v243, %v267
        %v271 = vmul.f32 %v249, %v267
        %v272 = vmul.f32 %v255, %v267
        %vm273 = vcmask 125952
        %v274 = vsel %vm273, %v269, 0.0
        %275 = vadd.xlane.f32.xlu0 %v274
        %v276 = vpop.xlane.xlu0 %275
        %v277 = vsel %vm273, %v270, 0.0
        %278 = vadd.xlane.f32.xlu0 %v277
        %v279 = vpop.xlane.xlu0 %278
        %v280 = vsel %vm273, %v271, 0.0
        %281 = vadd.xlane.f32.xlu0 %v280
        %v282 = vpop.xlane.xlu0 %281
        %v283 = vsel %vm273, %v272, 0.0
        %284 = vadd.xlane.f32.xlu0 %v283
        %v285 = vpop.xlane.xlu0 %284
        %v290 = vlaneseq
        %v291 = vand.u32 %v290, 127
        %v292 = vlaneseq
        %v293 = vshrl.u32 %v292, 7
        %v294 = vsub.s32 %v291, %v293
        %v295 = vrot.slane %v276, %v294
        %v296 = vlaneseq
        %v297 = vshrl.u32 %v296, 7
        %v298 = vsub.s32 %v291, %v297
        %v299 = vrot.slane %v279, %v298
        %v300 = vlaneseq
        %v301 = vshrl.u32 %v300, 7
        %v302 = vsub.s32 %v291, %v301
        %v303 = vrot.slane %v282, %v302
        %v304 = vlaneseq
        %v305 = vshrl.u32 %v304, 7
        %v306 = vsub.s32 %v291, %v305
        %v307 = vrot.slane %v285, %v306
        %vm308 = vcmask 1041409
        %v309 = vsel %vm308, %v299, %v295
        %vm310 = vcmask 1042434
        %v311 = vsel %vm310, %v303, %v309
        %vm312 = vcmask 1043459
        %v313 = vsel %vm312, %v307, %v311
        %vm315 = vcmask 27648
        %v316 = vsel %vm315, %v313, 0.0
        %317 = vadd.xlane.f32.xlu0 %v316
        %v318 = vpop.xlane.xlu0 %317
        %v320 = vlaneseq
        %v321 = vshrl.u32 %v320, 7
        %v322 = vsub.s32 0, %v321
        %v323 = vrot.slane %v262, %v322
        %v325 = vmul.f32 %v238, %v323
        %v326 = vmul.f32 %v239, %v323
        %v327 = vmul.f32 %v240, %v323
        %v328 = vmul.f32 %v241, %v323
        %v329 = vmul.f32 %v242, %v323
        %v330 = vmul.f32 %v244, %v323
        %v331 = vmul.f32 %v245, %v323
        %v332 = vmul.f32 %v246, %v323
        %v333 = vmul.f32 %v247, %v323
        %v334 = vmul.f32 %v248, %v323
        %v335 = vmul.f32 %v250, %v323
        %v336 = vmul.f32 %v251, %v323
        %v337 = vmul.f32 %v252, %v323
        %v338 = vmul.f32 %v253, %v323
        %v339 = vmul.f32 %v254, %v323
        %v340 = vmul.f32 %v256, %v323
        %v341 = vmul.f32 %v257, %v323
        %v342 = vmul.f32 %v258, %v323
        %v343 = vmul.f32 %v259, %v323
        %v344 = vmul.f32 %v260, %v323
        %v345 = vsel %vm273, %v325, 0.0
        %346 = vadd.xlane.f32.xlu0 %v345
        %v347 = vpop.xlane.xlu0 %346
        %v348 = vsel %vm273, %v326, 0.0
        %349 = vadd.xlane.f32.xlu0 %v348
        %v350 = vpop.xlane.xlu0 %349
        %v351 = vsel %vm273, %v327, 0.0
        %352 = vadd.xlane.f32.xlu0 %v351
        %v353 = vpop.xlane.xlu0 %352
        %v354 = vsel %vm273, %v328, 0.0
        %355 = vadd.xlane.f32.xlu0 %v354
        %v356 = vpop.xlane.xlu0 %355
        %v357 = vsel %vm273, %v329, 0.0
        %358 = vadd.xlane.f32.xlu0 %v357
        %v359 = vpop.xlane.xlu0 %358
        %v360 = vsel %vm273, %v330, 0.0
        %361 = vadd.xlane.f32.xlu0 %v360
        %v362 = vpop.xlane.xlu0 %361
        %v363 = vsel %vm273, %v331, 0.0
        %364 = vadd.xlane.f32.xlu0 %v363
        %v365 = vpop.xlane.xlu0 %364
        %v366 = vsel %vm273, %v332, 0.0
        %367 = vadd.xlane.f32.xlu0 %v366
        %v368 = vpop.xlane.xlu0 %367
        %v369 = vsel %vm273, %v333, 0.0
        %370 = vadd.xlane.f32.xlu0 %v369
        %v371 = vpop.xlane.xlu0 %370
        %v372 = vsel %vm273, %v334, 0.0
        %373 = vadd.xlane.f32.xlu0 %v372
        %v374 = vpop.xlane.xlu0 %373
        %v375 = vsel %vm273, %v335, 0.0
        %376 = vadd.xlane.f32.xlu0 %v375
        %v377 = vpop.xlane.xlu0 %376
        %v378 = vsel %vm273, %v336, 0.0
        %379 = vadd.xlane.f32.xlu0 %v378
        %v380 = vpop.xlane.xlu0 %379
        %v381 = vsel %vm273, %v337, 0.0
        %382 = vadd.xlane.f32.xlu0 %v381
        %v383 = vpop.xlane.xlu0 %382
        %v384 = vsel %vm273, %v338, 0.0
        %385 = vadd.xlane.f32.xlu0 %v384
        %v386 = vpop.xlane.xlu0 %385
        %v387 = vsel %vm273, %v339, 0.0
        %388 = vadd.xlane.f32.xlu0 %v387
        %v389 = vpop.xlane.xlu0 %388
        %v390 = vsel %vm273, %v340, 0.0
        %391 = vadd.xlane.f32.xlu0 %v390
        %v392 = vpop.xlane.xlu0 %391
        %v393 = vsel %vm273, %v341, 0.0
        %394 = vadd.xlane.f32.xlu0 %v393
        %v395 = vpop.xlane.xlu0 %394
        %v396 = vsel %vm273, %v342, 0.0
        %397 = vadd.xlane.f32.xlu0 %v396
        %v398 = vpop.xlane.xlu0 %397
        %v399 = vsel %vm273, %v343, 0.0
        %400 = vadd.xlane.f32.xlu0 %v399
        %v401 = vpop.xlane.xlu0 %400
        %v402 = vsel %vm273, %v344, 0.0
        %403 = vadd.xlane.f32.xlu0 %v402
        %v404 = vpop.xlane.xlu0 %403
        %v425 = vlaneseq
        %v426 = vshrl.u32 %v425, 7
        %v427 = vsub.s32 %v291, %v426
        %v428 = vrot.slane %v347, %v427
        %v429 = vlaneseq
        %v430 = vshrl.u32 %v429, 7
        %v431 = vsub.s32 %v291, %v430
        %v432 = vrot.slane %v350, %v431
        %v433 = vlaneseq
        %v434 = vshrl.u32 %v433, 7
        %v435 = vsub.s32 %v291, %v434
        %v436 = vrot.slane %v353, %v435
        %v437 = vlaneseq
        %v438 = vshrl.u32 %v437, 7
        %v439 = vsub.s32 %v291, %v438
        %v440 = vrot.slane %v356, %v439
        %v441 = vlaneseq
        %v442 = vshrl.u32 %v441, 7
        %v443 = vsub.s32 %v291, %v442
        %v444 = vrot.slane %v359, %v443
        %v445 = vlaneseq
        %v446 = vshrl.u32 %v445, 7
        %v447 = vsub.s32 %v291, %v446
        %v448 = vrot.slane %v362, %v447
        %v449 = vlaneseq
        %v450 = vshrl.u32 %v449, 7
        %v451 = vsub.s32 %v291, %v450
        %v452 = vrot.slane %v365, %v451
        %v453 = vlaneseq
        %v454 = vshrl.u32 %v453, 7
        %v455 = vsub.s32 %v291, %v454
        %v456 = vrot.slane %v368, %v455
        %v457 = vlaneseq
        %v458 = vshrl.u32 %v457, 7
        %v459 = vsub.s32 %v291, %v458
        %v460 = vrot.slane %v371, %v459
        %v461 = vlaneseq
        %v462 = vshrl.u32 %v461, 7
        %v463 = vsub.s32 %v291, %v462
        %v464 = vrot.slane %v374, %v463
        %v465 = vlaneseq
        %v466 = vshrl.u32 %v465, 7
        %v467 = vsub.s32 %v291, %v466
        %v468 = vrot.slane %v377, %v467
        %v469 = vlaneseq
        %v470 = vshrl.u32 %v469, 7
        %v471 = vsub.s32 %v291, %v470
        %v472 = vrot.slane %v380, %v471
        %v473 = vlaneseq
        %v474 = vshrl.u32 %v473, 7
        %v475 = vsub.s32 %v291, %v474
        %v476 = vrot.slane %v383, %v475
        %v477 = vlaneseq
        %v478 = vshrl.u32 %v477, 7
        %v479 = vsub.s32 %v291, %v478
        %v480 = vrot.slane %v386, %v479
        %v481 = vlaneseq
        %v482 = vshrl.u32 %v481, 7
        %v483 = vsub.s32 %v291, %v482
        %v484 = vrot.slane %v389, %v483
        %v485 = vlaneseq
        %v486 = vshrl.u32 %v485, 7
        %v487 = vsub.s32 %v291, %v486
        %v488 = vrot.slane %v392, %v487
        %v489 = vlaneseq
        %v490 = vshrl.u32 %v489, 7
        %v491 = vsub.s32 %v291, %v490
        %v492 = vrot.slane %v395, %v491
        %v493 = vlaneseq
        %v494 = vshrl.u32 %v493, 7
        %v495 = vsub.s32 %v291, %v494
        %v496 = vrot.slane %v398, %v495
        %v497 = vlaneseq
        %v498 = vshrl.u32 %v497, 7
        %v499 = vsub.s32 %v291, %v498
        %v500 = vrot.slane %v401, %v499
        %v501 = vlaneseq
        %v502 = vshrl.u32 %v501, 7
        %v503 = vsub.s32 %v291, %v502
        %v504 = vrot.slane %v404, %v503
        %v505 = vsel %vm308, %v432, %v428
        %v506 = vsel %vm310, %v436, %v505
        %v507 = vsel %vm312, %v440, %v506
        %vm508 = vcmask 1044484
        %v509 = vsel %vm508, %v444, %v507
        %v510 = vsel %vm308, %v452, %v448
        %v511 = vsel %vm310, %v456, %v510
        %v512 = vsel %vm312, %v460, %v511
        %v513 = vsel %vm508, %v464, %v512
        %v514 = vsel %vm308, %v472, %v468
        %v515 = vsel %vm310, %v476, %v514
        %v516 = vsel %vm312, %v480, %v515
        %v517 = vsel %vm508, %v484, %v516
        %v518 = vsel %vm308, %v492, %v488
        %v519 = vsel %vm310, %v496, %v518
        %v520 = vsel %vm312, %v500, %v519
        %v521 = vsel %vm508, %v504, %v520
        %vm526 = vcmask 28672
        %v527 = vsel %vm526, %v509, 0.0
        %528 = vadd.xlane.f32.xlu0 %v527
        %v529 = vpop.xlane.xlu0 %528
        %v530 = vsel %vm526, %v513, 0.0
        %531 = vadd.xlane.f32.xlu0 %v530
        %v532 = vpop.xlane.xlu0 %531
        %v533 = vsel %vm526, %v517, 0.0
        %534 = vadd.xlane.f32.xlu0 %v533
        %v535 = vpop.xlane.xlu0 %534
        %v536 = vsel %vm526, %v521, 0.0
        %537 = vadd.xlane.f32.xlu0 %v536
        %v538 = vpop.xlane.xlu0 %537
        %v543 = vlaneseq
        %v544 = vshrl.u32 %v543, 7
        %v545 = vsub.s32 %v291, %v544
        %v546 = vrot.slane %v529, %v545
        %v547 = vlaneseq
        %v548 = vshrl.u32 %v547, 7
        %v549 = vsub.s32 %v291, %v548
        %v550 = vrot.slane %v532, %v549
        %v551 = vlaneseq
        %v552 = vshrl.u32 %v551, 7
        %v553 = vsub.s32 %v291, %v552
        %v554 = vrot.slane %v535, %v553
        %v555 = vlaneseq
        %v556 = vshrl.u32 %v555, 7
        %v557 = vsub.s32 %v291, %v556
        %v558 = vrot.slane %v538, %v557
        %v559 = vsel %vm308, %v550, %v546
        %v560 = vsel %vm310, %v554, %v559
        %v561 = vsel %vm312, %v558, %v560
        %v563 = vmul.f32 %v318, %v561
        %v564 = vlaneseq
        %v565 = vshrl.u32 %v564, 7
        %v566 = vsub.s32 0, %v565
        %v567 = vrot.slane %v563, %v566
        %569 = vbcast.lane.b32.xlu0 %v567, 256
        %v570 = vpop.permute.xlu0 %569
        %v571 = vlaneseq
        %v572 = vshrl.u32 %v571, 7
        %v573 = vsub.s32 1, %v572
        %v574 = vrot.slane %v563, %v573
        %576 = vbcast.lane.b32.xlu0 %v574, 256
        %v577 = vpop.permute.xlu0 %576
        %v578 = vlaneseq
        %v579 = vshrl.u32 %v578, 7
        %v580 = vsub.s32 2, %v579
        %v581 = vrot.slane %v563, %v580
        %583 = vbcast.lane.b32.xlu0 %v581, 256
        %v584 = vpop.permute.xlu0 %583
        %v585 = vlaneseq
        %v586 = vshrl.u32 %v585, 7
        %v587 = vsub.s32 3, %v586
        %v588 = vrot.slane %v563, %v587
        %590 = vbcast.lane.b32.xlu0 %v588, 256
        %v591 = vpop.permute.xlu0 %590
        %v592 = vlaneseq
        %v593 = vshrl.u32 %v592, 7
        %v594 = vsub.s32 0, %v593
        %v595 = vrot.slane %v570, %v594
        %v596 = vlaneseq
        %v597 = vshrl.u32 %v596, 7
        %v598 = vsub.s32 1, %v597
        %v599 = vrot.slane %v570, %v598
        %v600 = vlaneseq
        %v601 = vshrl.u32 %v600, 7
        %v602 = vsub.s32 2, %v601
        %v603 = vrot.slane %v570, %v602
        %v604 = vlaneseq
        %v605 = vshrl.u32 %v604, 7
        %v606 = vsub.s32 3, %v605
        %v607 = vrot.slane %v570, %v606
        %v608 = vlaneseq
        %v609 = vshrl.u32 %v608, 7
        %v610 = vsub.s32 4, %v609
        %v611 = vrot.slane %v570, %v610
        %v612 = vlaneseq
        %v613 = vshrl.u32 %v612, 7
        %v614 = vsub.s32 0, %v613
        %v615 = vrot.slane %v577, %v614
        %v616 = vlaneseq
        %v617 = vshrl.u32 %v616, 7
        %v618 = vsub.s32 1, %v617
        %v619 = vrot.slane %v577, %v618
        %v620 = vlaneseq
        %v621 = vshrl.u32 %v620, 7
        %v622 = vsub.s32 2, %v621
        %v623 = vrot.slane %v577, %v622
        %v624 = vlaneseq
        %v625 = vshrl.u32 %v624, 7
        %v626 = vsub.s32 3, %v625
        %v627 = vrot.slane %v577, %v626
        %v628 = vlaneseq
        %v629 = vshrl.u32 %v628, 7
        %v630 = vsub.s32 4, %v629
        %v631 = vrot.slane %v577, %v630
        %v632 = vlaneseq
        %v633 = vshrl.u32 %v632, 7
        %v634 = vsub.s32 0, %v633
        %v635 = vrot.slane %v584, %v634
        %v636 = vlaneseq
        %v637 = vshrl.u32 %v636, 7
        %v638 = vsub.s32 1, %v637
        %v639 = vrot.slane %v584, %v638
        %v640 = vlaneseq
        %v641 = vshrl.u32 %v640, 7
        %v642 = vsub.s32 2, %v641
        %v643 = vrot.slane %v584, %v642
        %v644 = vlaneseq
        %v645 = vshrl.u32 %v644, 7
        %v646 = vsub.s32 3, %v645
        %v647 = vrot.slane %v584, %v646
        %v648 = vlaneseq
        %v649 = vshrl.u32 %v648, 7
        %v650 = vsub.s32 4, %v649
        %v651 = vrot.slane %v584, %v650
        %v652 = vlaneseq
        %v653 = vshrl.u32 %v652, 7
        %v654 = vsub.s32 0, %v653
        %v655 = vrot.slane %v591, %v654
        %v656 = vlaneseq
        %v657 = vshrl.u32 %v656, 7
        %v658 = vsub.s32 1, %v657
        %v659 = vrot.slane %v591, %v658
        %v660 = vlaneseq
        %v661 = vshrl.u32 %v660, 7
        %v662 = vsub.s32 2, %v661
        %v663 = vrot.slane %v591, %v662
        %v664 = vlaneseq
        %v665 = vshrl.u32 %v664, 7
        %v666 = vsub.s32 3, %v665
        %v667 = vrot.slane %v591, %v666
        %v668 = vlaneseq
        %v669 = vshrl.u32 %v668, 7
        %v670 = vsub.s32 4, %v669
        %v671 = vrot.slane %v591, %v670
        %v672 = vmul.f32 %v595, %v238
        %v673 = vmul.f32 %v599, %v239
        %v674 = vmul.f32 %v603, %v240
        %v675 = vmul.f32 %v607, %v241
        %v676 = vmul.f32 %v611, %v242
        %v677 = vmul.f32 %v615, %v244
        %v678 = vmul.f32 %v619, %v245
        %v679 = vmul.f32 %v623, %v246
        %v680 = vmul.f32 %v627, %v247
        %v681 = vmul.f32 %v631, %v248
        %v682 = vmul.f32 %v635, %v250
        %v683 = vmul.f32 %v639, %v251
        %v684 = vmul.f32 %v643, %v252
        %v685 = vmul.f32 %v647, %v253
        %v686 = vmul.f32 %v651, %v254
        %v687 = vmul.f32 %v655, %v256
        %v688 = vmul.f32 %v659, %v257
        %v689 = vmul.f32 %v663, %v258
        %v690 = vmul.f32 %v667, %v259
        %v691 = vmul.f32 %v671, %v260
        %v692 = vsel %vm273, %v672, 0.0
        %v693 = vsel %vm273, %v673, 0.0
        %v694 = vadd.f32 %v692, %v693
        %v695 = vsel %vm273, %v674, 0.0
        %v696 = vadd.f32 %v694, %v695
        %v697 = vsel %vm273, %v675, 0.0
        %v698 = vadd.f32 %v696, %v697
        %v699 = vsel %vm273, %v676, 0.0
        %v700 = vadd.f32 %v698, %v699
        %v701 = vsel %vm273, %v677, 0.0
        %v702 = vsel %vm273, %v678, 0.0
        %v703 = vadd.f32 %v701, %v702
        %v704 = vsel %vm273, %v679, 0.0
        %v705 = vadd.f32 %v703, %v704
        %v706 = vsel %vm273, %v680, 0.0
        %v707 = vadd.f32 %v705, %v706
        %v708 = vsel %vm273, %v681, 0.0
        %v709 = vadd.f32 %v707, %v708
        %v710 = vsel %vm273, %v682, 0.0
        %v711 = vsel %vm273, %v683, 0.0
        %v712 = vadd.f32 %v710, %v711
        %v713 = vsel %vm273, %v684, 0.0
        %v714 = vadd.f32 %v712, %v713
        %v715 = vsel %vm273, %v685, 0.0
        %v716 = vadd.f32 %v714, %v715
        %v717 = vsel %vm273, %v686, 0.0
        %v718 = vadd.f32 %v716, %v717
        %v719 = vsel %vm273, %v687, 0.0
        %v720 = vsel %vm273, %v688, 0.0
        %v721 = vadd.f32 %v719, %v720
        %v722 = vsel %vm273, %v689, 0.0
        %v723 = vadd.f32 %v721, %v722
        %v724 = vsel %vm273, %v690, 0.0
        %v725 = vadd.f32 %v723, %v724
        %v726 = vsel %vm273, %v691, 0.0
        %v727 = vadd.f32 %v725, %v726
        %v728 = vlaneseq
        %v729 = vshrl.u32 %v728, 7
        %v730 = vsub.s32 0, %v729
        %v731 = vrot.slane %v237, %v730
        %733 = vbcast.lane.b32.xlu0 %v731, 256
        %v734 = vpop.permute.xlu0 %733
        %s736 = sor.u32 256, 8
        %737 = vbcast.lane.b32.xlu0 %v731, %s736
        %v738 = vpop.permute.xlu0 %737
        %v739 = vlaneseq
        %v740 = vshrl.u32 %v739, 7
        %v741 = vsub.s32 1, %v740
        %v742 = vrot.slane %v237, %v741
        %744 = vbcast.lane.b32.xlu0 %v742, 256
        %v745 = vpop.permute.xlu0 %744
        %s747 = sor.u32 256, 8
        %748 = vbcast.lane.b32.xlu0 %v742, %s747
        %v749 = vpop.permute.xlu0 %748
        %v750 = vlaneseq
        %v751 = vshrl.u32 %v750, 7
        %v752 = vsub.s32 2, %v751
        %v753 = vrot.slane %v237, %v752
        %755 = vbcast.lane.b32.xlu0 %v753, 256
        %v756 = vpop.permute.xlu0 %755
        %s758 = sor.u32 256, 8
        %759 = vbcast.lane.b32.xlu0 %v753, %s758
        %v760 = vpop.permute.xlu0 %759
        %v761 = vlaneseq
        %v762 = vshrl.u32 %v761, 7
        %v763 = vsub.s32 3, %v762
        %v764 = vrot.slane %v237, %v763
        %766 = vbcast.lane.b32.xlu0 %v764, 256
        %v767 = vpop.permute.xlu0 %766
        %s769 = sor.u32 256, 8
        %770 = vbcast.lane.b32.xlu0 %v764, %s769
        %v771 = vpop.permute.xlu0 %770
        %v772 = vlaneseq
        %v773 = vshrl.u32 %v772, 7
        %v774 = vsub.s32 0, %v773
        %v775 = vrot.slane %v243, %v774
        %777 = vbcast.lane.b32.xlu0 %v775, 256
        %v778 = vpop.permute.xlu0 %777
        %s780 = sor.u32 256, 8
        %781 = vbcast.lane.b32.xlu0 %v775, %s780
        %v782 = vpop.permute.xlu0 %781
        %v783 = vlaneseq
        %v784 = vshrl.u32 %v783, 7
        %v785 = vsub.s32 1, %v784
        %v786 = vrot.slane %v243, %v785
        %788 = vbcast.lane.b32.xlu0 %v786, 256
        %v789 = vpop.permute.xlu0 %788
        %s791 = sor.u32 256, 8
        %792 = vbcast.lane.b32.xlu0 %v786, %s791
        %v793 = vpop.permute.xlu0 %792
        %v794 = vlaneseq
        %v795 = vshrl.u32 %v794, 7
        %v796 = vsub.s32 2, %v795
        %v797 = vrot.slane %v243, %v796
        %799 = vbcast.lane.b32.xlu0 %v797, 256
        %v800 = vpop.permute.xlu0 %799
        %s802 = sor.u32 256, 8
        %803 = vbcast.lane.b32.xlu0 %v797, %s802
        %v804 = vpop.permute.xlu0 %803
        %v805 = vlaneseq
        %v806 = vshrl.u32 %v805, 7
        %v807 = vsub.s32 3, %v806
        %v808 = vrot.slane %v243, %v807
        %810 = vbcast.lane.b32.xlu0 %v808, 256
        %v811 = vpop.permute.xlu0 %810
        %s813 = sor.u32 256, 8
        %814 = vbcast.lane.b32.xlu0 %v808, %s813
        %v815 = vpop.permute.xlu0 %814
        %v816 = vlaneseq
        %v817 = vshrl.u32 %v816, 7
        %v818 = vsub.s32 0, %v817
        %v819 = vrot.slane %v249, %v818
        %821 = vbcast.lane.b32.xlu0 %v819, 256
        %v822 = vpop.permute.xlu0 %821
        %s824 = sor.u32 256, 8
        %825 = vbcast.lane.b32.xlu0 %v819, %s824
        %v826 = vpop.permute.xlu0 %825
        %v827 = vlaneseq
        %v828 = vshrl.u32 %v827, 7
        %v829 = vsub.s32 1, %v828
        %v830 = vrot.slane %v249, %v829
        %832 = vbcast.lane.b32.xlu0 %v830, 256
        %v833 = vpop.permute.xlu0 %832
        %s835 = sor.u32 256, 8
        %836 = vbcast.lane.b32.xlu0 %v830, %s835
        %v837 = vpop.permute.xlu0 %836
        %v838 = vlaneseq
        %v839 = vshrl.u32 %v838, 7
        %v840 = vsub.s32 2, %v839
        %v841 = vrot.slane %v249, %v840
        %843 = vbcast.lane.b32.xlu0 %v841, 256
        %v844 = vpop.permute.xlu0 %843
        %s846 = sor.u32 256, 8
        %847 = vbcast.lane.b32.xlu0 %v841, %s846
        %v848 = vpop.permute.xlu0 %847
        %v849 = vlaneseq
        %v850 = vshrl.u32 %v849, 7
        %v851 = vsub.s32 3, %v850
        %v852 = vrot.slane %v249, %v851
        %854 = vbcast.lane.b32.xlu0 %v852, 256
        %v855 = vpop.permute.xlu0 %854
        %s857 = sor.u32 256, 8
        %858 = vbcast.lane.b32.xlu0 %v852, %s857
        %v859 = vpop.permute.xlu0 %858
        %v860 = vlaneseq
        %v861 = vshrl.u32 %v860, 7
        %v862 = vsub.s32 0, %v861
        %v863 = vrot.slane %v255, %v862
        %865 = vbcast.lane.b32.xlu0 %v863, 256
        %v866 = vpop.permute.xlu0 %865
        %s868 = sor.u32 256, 8
        %869 = vbcast.lane.b32.xlu0 %v863, %s868
        %v870 = vpop.permute.xlu0 %869
        %v871 = vlaneseq
        %v872 = vshrl.u32 %v871, 7
        %v873 = vsub.s32 1, %v872
        %v874 = vrot.slane %v255, %v873
        %876 = vbcast.lane.b32.xlu0 %v874, 256
        %v877 = vpop.permute.xlu0 %876
        %s879 = sor.u32 256, 8
        %880 = vbcast.lane.b32.xlu0 %v874, %s879
        %v881 = vpop.permute.xlu0 %880
        %v882 = vlaneseq
        %v883 = vshrl.u32 %v882, 7
        %v884 = vsub.s32 2, %v883
        %v885 = vrot.slane %v255, %v884
        %887 = vbcast.lane.b32.xlu0 %v885, 256
        %v888 = vpop.permute.xlu0 %887
        %s890 = sor.u32 256, 8
        %891 = vbcast.lane.b32.xlu0 %v885, %s890
        %v892 = vpop.permute.xlu0 %891
        %v893 = vlaneseq
        %v894 = vshrl.u32 %v893, 7
        %v895 = vsub.s32 3, %v894
        %v896 = vrot.slane %v255, %v895
        %898 = vbcast.lane.b32.xlu0 %v896, 256
        %v899 = vpop.permute.xlu0 %898
        %s901 = sor.u32 256, 8
        %902 = vbcast.lane.b32.xlu0 %v896, %s901
        %v903 = vpop.permute.xlu0 %902
        %v909 = vunpack.c.l.s4 1966171168
        %v910 = vunpack.c.0.s8 %v909
        %v911 = vlaneseq
        %v912 = vshrl.u32 %v911, 7
        %v913 = vsub.s32 %v910, %v912
        %v914 = vrot.slane %v700, %v913
        %v915 = vcombine.high %v914, %v914
        %v917 = vunpack.c.l.s4 1966171168
        %v918 = vunpack.c.0.s8 %v917
        %v919 = vlaneseq
        %v920 = vshrl.u32 %v919, 7
        %v921 = vsub.s32 %v918, %v920
        %v922 = vrot.slane %v914, %v921
        %v924 = vunpack.c.l.s4 1966171168
        %v925 = vunpack.c.0.s8 %v924
        %v926 = vlaneseq
        %v927 = vshrl.u32 %v926, 7
        %v928 = vsub.s32 %v925, %v927
        %v929 = vrot.slane %v915, %v928
        %v930 = vcombine.high %v922, %v922
        %v931 = vcombine.high %v929, %v929
        %v933 = vunpack.c.l.s4 1966171168
        %v934 = vunpack.c.0.s8 %v933
        %v935 = vlaneseq
        %v936 = vshrl.u32 %v935, 7
        %v937 = vsub.s32 %v934, %v936
        %v938 = vrot.slane %v709, %v937
        %v939 = vcombine.high %v938, %v938
        %v941 = vunpack.c.l.s4 1966171168
        %v942 = vunpack.c.0.s8 %v941
        %v943 = vlaneseq
        %v944 = vshrl.u32 %v943, 7
        %v945 = vsub.s32 %v942, %v944
        %v946 = vrot.slane %v938, %v945
        %v948 = vunpack.c.l.s4 1966171168
        %v949 = vunpack.c.0.s8 %v948
        %v950 = vlaneseq
        %v951 = vshrl.u32 %v950, 7
        %v952 = vsub.s32 %v949, %v951
        %v953 = vrot.slane %v939, %v952
        %v954 = vcombine.high %v946, %v946
        %v955 = vcombine.high %v953, %v953
        %v957 = vunpack.c.l.s4 1966171168
        %v958 = vunpack.c.0.s8 %v957
        %v959 = vlaneseq
        %v960 = vshrl.u32 %v959, 7
        %v961 = vsub.s32 %v958, %v960
        %v962 = vrot.slane %v718, %v961
        %v963 = vcombine.high %v962, %v962
        %v965 = vunpack.c.l.s4 1966171168
        %v966 = vunpack.c.0.s8 %v965
        %v967 = vlaneseq
        %v968 = vshrl.u32 %v967, 7
        %v969 = vsub.s32 %v966, %v968
        %v970 = vrot.slane %v962, %v969
        %v972 = vunpack.c.l.s4 1966171168
        %v973 = vunpack.c.0.s8 %v972
        %v974 = vlaneseq
        %v975 = vshrl.u32 %v974, 7
        %v976 = vsub.s32 %v973, %v975
        %v977 = vrot.slane %v963, %v976
        %v978 = vcombine.high %v970, %v970
        %v979 = vcombine.high %v977, %v977
        %v981 = vunpack.c.l.s4 1966171168
        %v982 = vunpack.c.0.s8 %v981
        %v983 = vlaneseq
        %v984 = vshrl.u32 %v983, 7
        %v985 = vsub.s32 %v982, %v984
        %v986 = vrot.slane %v727, %v985
        %v987 = vcombine.high %v986, %v986
        %v989 = vunpack.c.l.s4 1966171168
        %v990 = vunpack.c.0.s8 %v989
        %v991 = vlaneseq
        %v992 = vshrl.u32 %v991, 7
        %v993 = vsub.s32 %v990, %v992
        %v994 = vrot.slane %v986, %v993
        %v996 = vunpack.c.l.s4 1966171168
        %v997 = vunpack.c.0.s8 %v996
        %v998 = vlaneseq
        %v999 = vshrl.u32 %v998, 7
        %v1000 = vsub.s32 %v997, %v999
        %v1001 = vrot.slane %v987, %v1000
        %v1002 = vcombine.high %v994, %v994
        %v1003 = vcombine.high %v1001, %v1001
        %v1004 = vlaneseq
        %v1005 = vshrl.u32 %v1004, 7
        %v1006 = vsub.s32 0, %v1005
        %v1007 = vrot.slane %v922, %v1006
        %v1008 = vlaneseq
        %v1009 = vshrl.u32 %v1008, 7
        %v1010 = vsub.s32 0, %v1009
        %v1011 = vrot.slane %v929, %v1010
        %v1012 = vlaneseq
        %v1013 = vshrl.u32 %v1012, 7
        %v1014 = vsub.s32 0, %v1013
        %v1015 = vrot.slane %v930, %v1014
        %v1016 = vlaneseq
        %v1017 = vshrl.u32 %v1016, 7
        %v1018 = vsub.s32 0, %v1017
        %v1019 = vrot.slane %v931, %v1018
        %v1020 = vlaneseq
        %v1021 = vshrl.u32 %v1020, 7
        %v1022 = vsub.s32 0, %v1021
        %v1023 = vrot.slane %v946, %v1022
        %v1024 = vlaneseq
        %v1025 = vshrl.u32 %v1024, 7
        %v1026 = vsub.s32 0, %v1025
        %v1027 = vrot.slane %v953, %v1026
        %v1028 = vlaneseq
        %v1029 = vshrl.u32 %v1028, 7
        %v1030 = vsub.s32 0, %v1029
        %v1031 = vrot.slane %v954, %v1030
        %v1032 = vlaneseq
        %v1033 = vshrl.u32 %v1032, 7
        %v1034 = vsub.s32 0, %v1033
        %v1035 = vrot.slane %v955, %v1034
        %v1036 = vlaneseq
        %v1037 = vshrl.u32 %v1036, 7
        %v1038 = vsub.s32 0, %v1037
        %v1039 = vrot.slane %v970, %v1038
        %v1040 = vlaneseq
        %v1041 = vshrl.u32 %v1040, 7
        %v1042 = vsub.s32 0, %v1041
        %v1043 = vrot.slane %v977, %v1042
        %v1044 = vlaneseq
        %v1045 = vshrl.u32 %v1044, 7
        %v1046 = vsub.s32 0, %v1045
        %v1047 = vrot.slane %v978, %v1046
        %v1048 = vlaneseq
        %v1049 = vshrl.u32 %v1048, 7
        %v1050 = vsub.s32 0, %v1049
        %v1051 = vrot.slane %v979, %v1050
        %v1052 = vlaneseq
        %v1053 = vshrl.u32 %v1052, 7
        %v1054 = vsub.s32 0, %v1053
        %v1055 = vrot.slane %v994, %v1054
        %v1056 = vlaneseq
        %v1057 = vshrl.u32 %v1056, 7
        %v1058 = vsub.s32 0, %v1057
        %v1059 = vrot.slane %v1001, %v1058
        %v1060 = vlaneseq
        %v1061 = vshrl.u32 %v1060, 7
        %v1062 = vsub.s32 0, %v1061
        %v1063 = vrot.slane %v1002, %v1062
        %v1064 = vlaneseq
        %v1065 = vshrl.u32 %v1064, 7
        %v1066 = vsub.s32 0, %v1065
        %v1067 = vrot.slane %v1003, %v1066
        %v1084 = vmul.f32 %v734, %v1007
        %v1085 = vmul.f32 %v738, %v1007
        %v1086 = vmul.f32 %v745, %v1011
        %v1087 = vmul.f32 %v749, %v1011
        %v1088 = vmul.f32 %v756, %v1015
        %v1089 = vmul.f32 %v760, %v1015
        %v1090 = vmul.f32 %v767, %v1019
        %v1091 = vmul.f32 %v771, %v1019
        %v1092 = vmul.f32 %v778, %v1023
        %v1093 = vmul.f32 %v782, %v1023
        %v1094 = vmul.f32 %v789, %v1027
        %v1095 = vmul.f32 %v793, %v1027
        %v1096 = vmul.f32 %v800, %v1031
        %v1097 = vmul.f32 %v804, %v1031
        %v1098 = vmul.f32 %v811, %v1035
        %v1099 = vmul.f32 %v815, %v1035
        %v1100 = vmul.f32 %v822, %v1039
        %v1101 = vmul.f32 %v826, %v1039
        %v1102 = vmul.f32 %v833, %v1043
        %v1103 = vmul.f32 %v837, %v1043
        %v1104 = vmul.f32 %v844, %v1047
        %v1105 = vmul.f32 %v848, %v1047
        %v1106 = vmul.f32 %v855, %v1051
        %v1107 = vmul.f32 %v859, %v1051
        %v1108 = vmul.f32 %v866, %v1055
        %v1109 = vmul.f32 %v870, %v1055
        %v1110 = vmul.f32 %v877, %v1059
        %v1111 = vmul.f32 %v881, %v1059
        %v1112 = vmul.f32 %v888, %v1063
        %v1113 = vmul.f32 %v892, %v1063
        %v1114 = vmul.f32 %v899, %v1067
        %v1115 = vmul.f32 %v903, %v1067
        %v1116 = vlaneseq
        %v1117 = vshrl.u32 %v1116, 7
        %v1118 = vsub.s32 0, %v1117
        %v1119 = vrot.slane %v700, %v1118
        %1121 = vbcast.lane.b32.xlu0 %v1119, 256
        %v1122 = vpop.permute.xlu0 %1121
        %s1124 = sor.u32 256, 8
        %1125 = vbcast.lane.b32.xlu0 %v1119, %s1124
        %v1126 = vpop.permute.xlu0 %1125
        %v1127 = vlaneseq
        %v1128 = vshrl.u32 %v1127, 7
        %v1129 = vsub.s32 1, %v1128
        %v1130 = vrot.slane %v700, %v1129
        %1132 = vbcast.lane.b32.xlu0 %v1130, 256
        %v1133 = vpop.permute.xlu0 %1132
        %s1135 = sor.u32 256, 8
        %1136 = vbcast.lane.b32.xlu0 %v1130, %s1135
        %v1137 = vpop.permute.xlu0 %1136
        %v1138 = vlaneseq
        %v1139 = vshrl.u32 %v1138, 7
        %v1140 = vsub.s32 2, %v1139
        %v1141 = vrot.slane %v700, %v1140
        %1143 = vbcast.lane.b32.xlu0 %v1141, 256
        %v1144 = vpop.permute.xlu0 %1143
        %s1146 = sor.u32 256, 8
        %1147 = vbcast.lane.b32.xlu0 %v1141, %s1146
        %v1148 = vpop.permute.xlu0 %1147
        %v1149 = vlaneseq
        %v1150 = vshrl.u32 %v1149, 7
        %v1151 = vsub.s32 3, %v1150
        %v1152 = vrot.slane %v700, %v1151
        %1154 = vbcast.lane.b32.xlu0 %v1152, 256
        %v1155 = vpop.permute.xlu0 %1154
        %s1157 = sor.u32 256, 8
        %1158 = vbcast.lane.b32.xlu0 %v1152, %s1157
        %v1159 = vpop.permute.xlu0 %1158
        %v1160 = vlaneseq
        %v1161 = vshrl.u32 %v1160, 7
        %v1162 = vsub.s32 0, %v1161
        %v1163 = vrot.slane %v709, %v1162
        %1165 = vbcast.lane.b32.xlu0 %v1163, 256
        %v1166 = vpop.permute.xlu0 %1165
        %s1168 = sor.u32 256, 8
        %1169 = vbcast.lane.b32.xlu0 %v1163, %s1168
        %v1170 = vpop.permute.xlu0 %1169
        %v1171 = vlaneseq
        %v1172 = vshrl.u32 %v1171, 7
        %v1173 = vsub.s32 1, %v1172
        %v1174 = vrot.slane %v709, %v1173
        %1176 = vbcast.lane.b32.xlu0 %v1174, 256
        %v1177 = vpop.permute.xlu0 %1176
        %s1179 = sor.u32 256, 8
        %1180 = vbcast.lane.b32.xlu0 %v1174, %s1179
        %v1181 = vpop.permute.xlu0 %1180
        %v1182 = vlaneseq
        %v1183 = vshrl.u32 %v1182, 7
        %v1184 = vsub.s32 2, %v1183
        %v1185 = vrot.slane %v709, %v1184
        %1187 = vbcast.lane.b32.xlu0 %v1185, 256
        %v1188 = vpop.permute.xlu0 %1187
        %s1190 = sor.u32 256, 8
        %1191 = vbcast.lane.b32.xlu0 %v1185, %s1190
        %v1192 = vpop.permute.xlu0 %1191
        %v1193 = vlaneseq
        %v1194 = vshrl.u32 %v1193, 7
        %v1195 = vsub.s32 3, %v1194
        %v1196 = vrot.slane %v709, %v1195
        %1198 = vbcast.lane.b32.xlu0 %v1196, 256
        %v1199 = vpop.permute.xlu0 %1198
        %s1201 = sor.u32 256, 8
        %1202 = vbcast.lane.b32.xlu0 %v1196, %s1201
        %v1203 = vpop.permute.xlu0 %1202
        %v1204 = vlaneseq
        %v1205 = vshrl.u32 %v1204, 7
        %v1206 = vsub.s32 0, %v1205
        %v1207 = vrot.slane %v718, %v1206
        %1209 = vbcast.lane.b32.xlu0 %v1207, 256
        %v1210 = vpop.permute.xlu0 %1209
        %s1212 = sor.u32 256, 8
        %1213 = vbcast.lane.b32.xlu0 %v1207, %s1212
        %v1214 = vpop.permute.xlu0 %1213
        %v1215 = vlaneseq
        %v1216 = vshrl.u32 %v1215, 7
        %v1217 = vsub.s32 1, %v1216
        %v1218 = vrot.slane %v718, %v1217
        %1220 = vbcast.lane.b32.xlu0 %v1218, 256
        %v1221 = vpop.permute.xlu0 %1220
        %s1223 = sor.u32 256, 8
        %1224 = vbcast.lane.b32.xlu0 %v1218, %s1223
        %v1225 = vpop.permute.xlu0 %1224
        %v1226 = vlaneseq
        %v1227 = vshrl.u32 %v1226, 7
        %v1228 = vsub.s32 2, %v1227
        %v1229 = vrot.slane %v718, %v1228
        %1231 = vbcast.lane.b32.xlu0 %v1229, 256
        %v1232 = vpop.permute.xlu0 %1231
        %s1234 = sor.u32 256, 8
        %1235 = vbcast.lane.b32.xlu0 %v1229, %s1234
        %v1236 = vpop.permute.xlu0 %1235
        %v1237 = vlaneseq
        %v1238 = vshrl.u32 %v1237, 7
        %v1239 = vsub.s32 3, %v1238
        %v1240 = vrot.slane %v718, %v1239
        %1242 = vbcast.lane.b32.xlu0 %v1240, 256
        %v1243 = vpop.permute.xlu0 %1242
        %s1245 = sor.u32 256, 8
        %1246 = vbcast.lane.b32.xlu0 %v1240, %s1245
        %v1247 = vpop.permute.xlu0 %1246
        %v1248 = vlaneseq
        %v1249 = vshrl.u32 %v1248, 7
        %v1250 = vsub.s32 0, %v1249
        %v1251 = vrot.slane %v727, %v1250
        %1253 = vbcast.lane.b32.xlu0 %v1251, 256
        %v1254 = vpop.permute.xlu0 %1253
        %s1256 = sor.u32 256, 8
        %1257 = vbcast.lane.b32.xlu0 %v1251, %s1256
        %v1258 = vpop.permute.xlu0 %1257
        %v1259 = vlaneseq
        %v1260 = vshrl.u32 %v1259, 7
        %v1261 = vsub.s32 1, %v1260
        %v1262 = vrot.slane %v727, %v1261
        %1264 = vbcast.lane.b32.xlu0 %v1262, 256
        %v1265 = vpop.permute.xlu0 %1264
        %s1267 = sor.u32 256, 8
        %1268 = vbcast.lane.b32.xlu0 %v1262, %s1267
        %v1269 = vpop.permute.xlu0 %1268
        %v1270 = vlaneseq
        %v1271 = vshrl.u32 %v1270, 7
        %v1272 = vsub.s32 2, %v1271
        %v1273 = vrot.slane %v727, %v1272
        %1275 = vbcast.lane.b32.xlu0 %v1273, 256
        %v1276 = vpop.permute.xlu0 %1275
        %s1278 = sor.u32 256, 8
        %1279 = vbcast.lane.b32.xlu0 %v1273, %s1278
        %v1280 = vpop.permute.xlu0 %1279
        %v1281 = vlaneseq
        %v1282 = vshrl.u32 %v1281, 7
        %v1283 = vsub.s32 3, %v1282
        %v1284 = vrot.slane %v727, %v1283
        %1286 = vbcast.lane.b32.xlu0 %v1284, 256
        %v1287 = vpop.permute.xlu0 %1286
        %s1289 = sor.u32 256, 8
        %1290 = vbcast.lane.b32.xlu0 %v1284, %s1289
        %v1291 = vpop.permute.xlu0 %1290
        %v1297 = vunpack.c.l.s4 1966171168
        %v1298 = vunpack.c.0.s8 %v1297
        %v1299 = vlaneseq
        %v1300 = vshrl.u32 %v1299, 7
        %v1301 = vsub.s32 %v1298, %v1300
        %v1302 = vrot.slane %v237, %v1301
        %v1303 = vcombine.high %v1302, %v1302
        %v1305 = vunpack.c.l.s4 1966171168
        %v1306 = vunpack.c.0.s8 %v1305
        %v1307 = vlaneseq
        %v1308 = vshrl.u32 %v1307, 7
        %v1309 = vsub.s32 %v1306, %v1308
        %v1310 = vrot.slane %v1302, %v1309
        %v1312 = vunpack.c.l.s4 1966171168
        %v1313 = vunpack.c.0.s8 %v1312
        %v1314 = vlaneseq
        %v1315 = vshrl.u32 %v1314, 7
        %v1316 = vsub.s32 %v1313, %v1315
        %v1317 = vrot.slane %v1303, %v1316
        %v1318 = vcombine.high %v1310, %v1310
        %v1319 = vcombine.high %v1317, %v1317
        %v1321 = vunpack.c.l.s4 1966171168
        %v1322 = vunpack.c.0.s8 %v1321
        %v1323 = vlaneseq
        %v1324 = vshrl.u32 %v1323, 7
        %v1325 = vsub.s32 %v1322, %v1324
        %v1326 = vrot.slane %v243, %v1325
        %v1327 = vcombine.high %v1326, %v1326
        %v1329 = vunpack.c.l.s4 1966171168
        %v1330 = vunpack.c.0.s8 %v1329
        %v1331 = vlaneseq
        %v1332 = vshrl.u32 %v1331, 7
        %v1333 = vsub.s32 %v1330, %v1332
        %v1334 = vrot.slane %v1326, %v1333
        %v1336 = vunpack.c.l.s4 1966171168
        %v1337 = vunpack.c.0.s8 %v1336
        %v1338 = vlaneseq
        %v1339 = vshrl.u32 %v1338, 7
        %v1340 = vsub.s32 %v1337, %v1339
        %v1341 = vrot.slane %v1327, %v1340
        %v1342 = vcombine.high %v1334, %v1334
        %v1343 = vcombine.high %v1341, %v1341
        %v1345 = vunpack.c.l.s4 1966171168
        %v1346 = vunpack.c.0.s8 %v1345
        %v1347 = vlaneseq
        %v1348 = vshrl.u32 %v1347, 7
        %v1349 = vsub.s32 %v1346, %v1348
        %v1350 = vrot.slane %v249, %v1349
        %v1351 = vcombine.high %v1350, %v1350
        %v1353 = vunpack.c.l.s4 1966171168
        %v1354 = vunpack.c.0.s8 %v1353
        %v1355 = vlaneseq
        %v1356 = vshrl.u32 %v1355, 7
        %v1357 = vsub.s32 %v1354, %v1356
        %v1358 = vrot.slane %v1350, %v1357
        %v1360 = vunpack.c.l.s4 1966171168
        %v1361 = vunpack.c.0.s8 %v1360
        %v1362 = vlaneseq
        %v1363 = vshrl.u32 %v1362, 7
        %v1364 = vsub.s32 %v1361, %v1363
        %v1365 = vrot.slane %v1351, %v1364
        %v1366 = vcombine.high %v1358, %v1358
        %v1367 = vcombine.high %v1365, %v1365
        %v1369 = vunpack.c.l.s4 1966171168
        %v1370 = vunpack.c.0.s8 %v1369
        %v1371 = vlaneseq
        %v1372 = vshrl.u32 %v1371, 7
        %v1373 = vsub.s32 %v1370, %v1372
        %v1374 = vrot.slane %v255, %v1373
        %v1375 = vcombine.high %v1374, %v1374
        %v1377 = vunpack.c.l.s4 1966171168
        %v1378 = vunpack.c.0.s8 %v1377
        %v1379 = vlaneseq
        %v1380 = vshrl.u32 %v1379, 7
        %v1381 = vsub.s32 %v1378, %v1380
        %v1382 = vrot.slane %v1374, %v1381
        %v1384 = vunpack.c.l.s4 1966171168
        %v1385 = vunpack.c.0.s8 %v1384
        %v1386 = vlaneseq
        %v1387 = vshrl.u32 %v1386, 7
        %v1388 = vsub.s32 %v1385, %v1387
        %v1389 = vrot.slane %v1375, %v1388
        %v1390 = vcombine.high %v1382, %v1382
        %v1391 = vcombine.high %v1389, %v1389
        %v1392 = vlaneseq
        %v1393 = vshrl.u32 %v1392, 7
        %v1394 = vsub.s32 0, %v1393
        %v1395 = vrot.slane %v1310, %v1394
        %v1396 = vlaneseq
        %v1397 = vshrl.u32 %v1396, 7
        %v1398 = vsub.s32 0, %v1397
        %v1399 = vrot.slane %v1317, %v1398
        %v1400 = vlaneseq
        %v1401 = vshrl.u32 %v1400, 7
        %v1402 = vsub.s32 0, %v1401
        %v1403 = vrot.slane %v1318, %v1402
        %v1404 = vlaneseq
        %v1405 = vshrl.u32 %v1404, 7
        %v1406 = vsub.s32 0, %v1405
        %v1407 = vrot.slane %v1319, %v1406
        %v1408 = vlaneseq
        %v1409 = vshrl.u32 %v1408, 7
        %v1410 = vsub.s32 0, %v1409
        %v1411 = vrot.slane %v1334, %v1410
        %v1412 = vlaneseq
        %v1413 = vshrl.u32 %v1412, 7
        %v1414 = vsub.s32 0, %v1413
        %v1415 = vrot.slane %v1341, %v1414
        %v1416 = vlaneseq
        %v1417 = vshrl.u32 %v1416, 7
        %v1418 = vsub.s32 0, %v1417
        %v1419 = vrot.slane %v1342, %v1418
        %v1420 = vlaneseq
        %v1421 = vshrl.u32 %v1420, 7
        %v1422 = vsub.s32 0, %v1421
        %v1423 = vrot.slane %v1343, %v1422
        %v1424 = vlaneseq
        %v1425 = vshrl.u32 %v1424, 7
        %v1426 = vsub.s32 0, %v1425
        %v1427 = vrot.slane %v1358, %v1426
        %v1428 = vlaneseq
        %v1429 = vshrl.u32 %v1428, 7
        %v1430 = vsub.s32 0, %v1429
        %v1431 = vrot.slane %v1365, %v1430
        %v1432 = vlaneseq
        %v1433 = vshrl.u32 %v1432, 7
        %v1434 = vsub.s32 0, %v1433
        %v1435 = vrot.slane %v1366, %v1434
        %v1436 = vlaneseq
        %v1437 = vshrl.u32 %v1436, 7
        %v1438 = vsub.s32 0, %v1437
        %v1439 = vrot.slane %v1367, %v1438
        %v1440 = vlaneseq
        %v1441 = vshrl.u32 %v1440, 7
        %v1442 = vsub.s32 0, %v1441
        %v1443 = vrot.slane %v1382, %v1442
        %v1444 = vlaneseq
        %v1445 = vshrl.u32 %v1444, 7
        %v1446 = vsub.s32 0, %v1445
        %v1447 = vrot.slane %v1389, %v1446
        %v1448 = vlaneseq
        %v1449 = vshrl.u32 %v1448, 7
        %v1450 = vsub.s32 0, %v1449
        %v1451 = vrot.slane %v1390, %v1450
        %v1452 = vlaneseq
        %v1453 = vshrl.u32 %v1452, 7
        %v1454 = vsub.s32 0, %v1453
        %v1455 = vrot.slane %v1391, %v1454
        %v1472 = vmul.f32 %v1122, %v1395
        %v1473 = vmul.f32 %v1126, %v1395
        %v1474 = vmul.f32 %v1133, %v1399
        %v1475 = vmul.f32 %v1137, %v1399
        %v1476 = vmul.f32 %v1144, %v1403
        %v1477 = vmul.f32 %v1148, %v1403
        %v1478 = vmul.f32 %v1155, %v1407
        %v1479 = vmul.f32 %v1159, %v1407
        %v1480 = vmul.f32 %v1166, %v1411
        %v1481 = vmul.f32 %v1170, %v1411
        %v1482 = vmul.f32 %v1177, %v1415
        %v1483 = vmul.f32 %v1181, %v1415
        %v1484 = vmul.f32 %v1188, %v1419
        %v1485 = vmul.f32 %v1192, %v1419
        %v1486 = vmul.f32 %v1199, %v1423
        %v1487 = vmul.f32 %v1203, %v1423
        %v1488 = vmul.f32 %v1210, %v1427
        %v1489 = vmul.f32 %v1214, %v1427
        %v1490 = vmul.f32 %v1221, %v1431
        %v1491 = vmul.f32 %v1225, %v1431
        %v1492 = vmul.f32 %v1232, %v1435
        %v1493 = vmul.f32 %v1236, %v1435
        %v1494 = vmul.f32 %v1243, %v1439
        %v1495 = vmul.f32 %v1247, %v1439
        %v1496 = vmul.f32 %v1254, %v1443
        %v1497 = vmul.f32 %v1258, %v1443
        %v1498 = vmul.f32 %v1265, %v1447
        %v1499 = vmul.f32 %v1269, %v1447
        %v1500 = vmul.f32 %v1276, %v1451
        %v1501 = vmul.f32 %v1280, %v1451
        %v1502 = vmul.f32 %v1287, %v1455
        %v1503 = vmul.f32 %v1291, %v1455
        %v1504 = vadd.f32 %v1084, %v1472
        %v1505 = vadd.f32 %v1085, %v1473
        %v1506 = vadd.f32 %v1086, %v1474
        %v1507 = vadd.f32 %v1087, %v1475
        %v1508 = vadd.f32 %v1088, %v1476
        %v1509 = vadd.f32 %v1089, %v1477
        %v1510 = vadd.f32 %v1090, %v1478
        %v1511 = vadd.f32 %v1091, %v1479
        %v1512 = vadd.f32 %v1092, %v1480
        %v1513 = vadd.f32 %v1093, %v1481
        %v1514 = vadd.f32 %v1094, %v1482
        %v1515 = vadd.f32 %v1095, %v1483
        %v1516 = vadd.f32 %v1096, %v1484
        %v1517 = vadd.f32 %v1097, %v1485
        %v1518 = vadd.f32 %v1098, %v1486
        %v1519 = vadd.f32 %v1099, %v1487
        %v1520 = vadd.f32 %v1100, %v1488
        %v1521 = vadd.f32 %v1101, %v1489
        %v1522 = vadd.f32 %v1102, %v1490
        %v1523 = vadd.f32 %v1103, %v1491
        %v1524 = vadd.f32 %v1104, %v1492
        %v1525 = vadd.f32 %v1105, %v1493
        %v1526 = vadd.f32 %v1106, %v1494
        %v1527 = vadd.f32 %v1107, %v1495
        %v1528 = vadd.f32 %v1108, %v1496
        %v1529 = vadd.f32 %v1109, %v1497
        %v1530 = vadd.f32 %v1110, %v1498
        %v1531 = vadd.f32 %v1111, %v1499
        %v1532 = vadd.f32 %v1112, %v1500
        %v1533 = vadd.f32 %v1113, %v1501
        %v1534 = vadd.f32 %v1114, %v1502
        %v1535 = vadd.f32 %v1115, %v1503
        %v1536 = vand.u32 2147483647, %v1504
        %v1537 = vand.u32 2147483647, %v1505
        %v1538 = vand.u32 2147483647, %v1506
        %v1539 = vand.u32 2147483647, %v1507
        %v1540 = vand.u32 2147483647, %v1508
        %v1541 = vand.u32 2147483647, %v1509
        %v1542 = vand.u32 2147483647, %v1510
        %v1543 = vand.u32 2147483647, %v1511
        %v1544 = vand.u32 2147483647, %v1512
        %v1545 = vand.u32 2147483647, %v1513
        %v1546 = vand.u32 2147483647, %v1514
        %v1547 = vand.u32 2147483647, %v1515
        %v1548 = vand.u32 2147483647, %v1516
        %v1549 = vand.u32 2147483647, %v1517
        %v1550 = vand.u32 2147483647, %v1518
        %v1551 = vand.u32 2147483647, %v1519
        %v1552 = vand.u32 2147483647, %v1520
        %v1553 = vand.u32 2147483647, %v1521
        %v1554 = vand.u32 2147483647, %v1522
        %v1555 = vand.u32 2147483647, %v1523
        %v1556 = vand.u32 2147483647, %v1524
        %v1557 = vand.u32 2147483647, %v1525
        %v1558 = vand.u32 2147483647, %v1526
        %v1559 = vand.u32 2147483647, %v1527
        %v1560 = vand.u32 2147483647, %v1528
        %v1561 = vand.u32 2147483647, %v1529
        %v1562 = vand.u32 2147483647, %v1530
        %v1563 = vand.u32 2147483647, %v1531
        %v1564 = vand.u32 2147483647, %v1532
        %v1565 = vand.u32 2147483647, %v1533
        %v1566 = vand.u32 2147483647, %v1534
        %v1567 = vand.u32 2147483647, %v1535
        %v1568 = vmax.f32 %v1536, 1e-08
        %v1569 = vmax.f32 %v1537, 1e-08
        %v1570 = vmax.f32 %v1538, 1e-08
        %v1571 = vmax.f32 %v1539, 1e-08
        %v1572 = vmax.f32 %v1540, 1e-08
        %v1573 = vmax.f32 %v1541, 1e-08
        %v1574 = vmax.f32 %v1542, 1e-08
        %v1575 = vmax.f32 %v1543, 1e-08
        %v1576 = vmax.f32 %v1544, 1e-08
        %v1577 = vmax.f32 %v1545, 1e-08
        %v1578 = vmax.f32 %v1546, 1e-08
        %v1579 = vmax.f32 %v1547, 1e-08
        %v1580 = vmax.f32 %v1548, 1e-08
        %v1581 = vmax.f32 %v1549, 1e-08
        %v1582 = vmax.f32 %v1550, 1e-08
        %v1583 = vmax.f32 %v1551, 1e-08
        %v1584 = vmax.f32 %v1552, 1e-08
        %v1585 = vmax.f32 %v1553, 1e-08
        %v1586 = vmax.f32 %v1554, 1e-08
        %v1587 = vmax.f32 %v1555, 1e-08
        %v1588 = vmax.f32 %v1556, 1e-08
        %v1589 = vmax.f32 %v1557, 1e-08
        %v1590 = vmax.f32 %v1558, 1e-08
        %v1591 = vmax.f32 %v1559, 1e-08
        %v1592 = vmax.f32 %v1560, 1e-08
        %v1593 = vmax.f32 %v1561, 1e-08
        %v1594 = vmax.f32 %v1562, 1e-08
        %v1595 = vmax.f32 %v1563, 1e-08
        %v1596 = vmax.f32 %v1564, 1e-08
        %v1597 = vmax.f32 %v1565, 1e-08
        %v1598 = vmax.f32 %v1566, 1e-08
        %v1599 = vmax.f32 %v1567, 1e-08
        %v1600 = vrsqrt.pop %v1568
        %v1601 = vrsqrt.pop %v1569
        %v1602 = vrsqrt.pop %v1570
        %v1603 = vrsqrt.pop %v1571
        %v1604 = vrsqrt.pop %v1572
        %v1605 = vrsqrt.pop %v1573
        %v1606 = vrsqrt.pop %v1574
        %v1607 = vrsqrt.pop %v1575
        %v1608 = vrsqrt.pop %v1576
        %v1609 = vrsqrt.pop %v1577
        %v1610 = vrsqrt.pop %v1578
        %v1611 = vrsqrt.pop %v1579
        %v1612 = vrsqrt.pop %v1580
        %v1613 = vrsqrt.pop %v1581
        %v1614 = vrsqrt.pop %v1582
        %v1615 = vrsqrt.pop %v1583
        %v1616 = vrsqrt.pop %v1584
        %v1617 = vrsqrt.pop %v1585
        %v1618 = vrsqrt.pop %v1586
        %v1619 = vrsqrt.pop %v1587
        %v1620 = vrsqrt.pop %v1588
        %v1621 = vrsqrt.pop %v1589
        %v1622 = vrsqrt.pop %v1590
        %v1623 = vrsqrt.pop %v1591
        %v1624 = vrsqrt.pop %v1592
        %v1625 = vrsqrt.pop %v1593
        %v1626 = vrsqrt.pop %v1594
        %v1627 = vrsqrt.pop %v1595
        %v1628 = vrsqrt.pop %v1596
        %v1629 = vrsqrt.pop %v1597
        %v1630 = vrsqrt.pop %v1598
        %v1631 = vrsqrt.pop %v1599
        %v1632 = vmul.f32 %v1504, %v1600
        %v1633 = vmul.f32 %v1505, %v1601
        %v1634 = vmul.f32 %v1506, %v1602
        %v1635 = vmul.f32 %v1507, %v1603
        %v1636 = vmul.f32 %v1508, %v1604
        %v1637 = vmul.f32 %v1509, %v1605
        %v1638 = vmul.f32 %v1510, %v1606
        %v1639 = vmul.f32 %v1511, %v1607
        %v1640 = vmul.f32 %v1512, %v1608
        %v1641 = vmul.f32 %v1513, %v1609
        %v1642 = vmul.f32 %v1514, %v1610
        %v1643 = vmul.f32 %v1515, %v1611
        %v1644 = vmul.f32 %v1516, %v1612
        %v1645 = vmul.f32 %v1517, %v1613
        %v1646 = vmul.f32 %v1518, %v1614
        %v1647 = vmul.f32 %v1519, %v1615
        %v1648 = vmul.f32 %v1520, %v1616
        %v1649 = vmul.f32 %v1521, %v1617
        %v1650 = vmul.f32 %v1522, %v1618
        %v1651 = vmul.f32 %v1523, %v1619
        %v1652 = vmul.f32 %v1524, %v1620
        %v1653 = vmul.f32 %v1525, %v1621
        %v1654 = vmul.f32 %v1526, %v1622
        %v1655 = vmul.f32 %v1527, %v1623
        %v1656 = vmul.f32 %v1528, %v1624
        %v1657 = vmul.f32 %v1529, %v1625
        %v1658 = vmul.f32 %v1530, %v1626
        %v1659 = vmul.f32 %v1531, %v1627
        %v1660 = vmul.f32 %v1532, %v1628
        %v1661 = vmul.f32 %v1533, %v1629
        %v1662 = vmul.f32 %v1534, %v1630
        %v1663 = vmul.f32 %v1535, %v1631
        %v1664 = vand.u32 2147483647, %v1632
        %v1665 = vand.u32 2147483647, %v1633
        %v1666 = vand.u32 2147483647, %v1634
        %v1667 = vand.u32 2147483647, %v1635
        %v1668 = vand.u32 2147483647, %v1636
        %v1669 = vand.u32 2147483647, %v1637
        %v1670 = vand.u32 2147483647, %v1638
        %v1671 = vand.u32 2147483647, %v1639
        %v1672 = vand.u32 2147483647, %v1640
        %v1673 = vand.u32 2147483647, %v1641
        %v1674 = vand.u32 2147483647, %v1642
        %v1675 = vand.u32 2147483647, %v1643
        %v1676 = vand.u32 2147483647, %v1644
        %v1677 = vand.u32 2147483647, %v1645
        %v1678 = vand.u32 2147483647, %v1646
        %v1679 = vand.u32 2147483647, %v1647
        %v1680 = vand.u32 2147483647, %v1648
        %v1681 = vand.u32 2147483647, %v1649
        %v1682 = vand.u32 2147483647, %v1650
        %v1683 = vand.u32 2147483647, %v1651
        %v1684 = vand.u32 2147483647, %v1652
        %v1685 = vand.u32 2147483647, %v1653
        %v1686 = vand.u32 2147483647, %v1654
        %v1687 = vand.u32 2147483647, %v1655
        %v1688 = vand.u32 2147483647, %v1656
        %v1689 = vand.u32 2147483647, %v1657
        %v1690 = vand.u32 2147483647, %v1658
        %v1691 = vand.u32 2147483647, %v1659
        %v1692 = vand.u32 2147483647, %v1660
        %v1693 = vand.u32 2147483647, %v1661
        %v1694 = vand.u32 2147483647, %v1662
        %v1695 = vand.u32 2147483647, %v1663
        %vm1696 = vcmask 130048
        %v1697 = vsel %vm1696, %v1664, 0.0
        %v1698 = vsel %vm1696, %v1666, 0.0
        %v1699 = vadd.f32 %v1697, %v1698
        %v1700 = vsel %vm1696, %v1668, 0.0
        %v1701 = vadd.f32 %v1699, %v1700
        %v1702 = vsel %vm1696, %v1670, 0.0
        %v1703 = vadd.f32 %v1701, %v1702
        %v1704 = vsel %vm1696, %v1665, 0.0
        %v1705 = vsel %vm1696, %v1667, 0.0
        %v1706 = vadd.f32 %v1704, %v1705
        %v1707 = vsel %vm1696, %v1669, 0.0
        %v1708 = vadd.f32 %v1706, %v1707
        %v1709 = vsel %vm1696, %v1671, 0.0
        %v1710 = vadd.f32 %v1708, %v1709
        %v1711 = vsel %vm1696, %v1672, 0.0
        %v1712 = vsel %vm1696, %v1674, 0.0
        %v1713 = vadd.f32 %v1711, %v1712
        %v1714 = vsel %vm1696, %v1676, 0.0
        %v1715 = vadd.f32 %v1713, %v1714
        %v1716 = vsel %vm1696, %v1678, 0.0
        %v1717 = vadd.f32 %v1715, %v1716
        %v1718 = vsel %vm1696, %v1673, 0.0
        %v1719 = vsel %vm1696, %v1675, 0.0
        %v1720 = vadd.f32 %v1718, %v1719
        %v1721 = vsel %vm1696, %v1677, 0.0
        %v1722 = vadd.f32 %v1720, %v1721
        %v1723 = vsel %vm1696, %v1679, 0.0
        %v1724 = vadd.f32 %v1722, %v1723
        %v1725 = vsel %vm1696, %v1680, 0.0
        %v1726 = vsel %vm1696, %v1682, 0.0
        %v1727 = vadd.f32 %v1725, %v1726
        %v1728 = vsel %vm1696, %v1684, 0.0
        %v1729 = vadd.f32 %v1727, %v1728
        %v1730 = vsel %vm1696, %v1686, 0.0
        %v1731 = vadd.f32 %v1729, %v1730
        %v1732 = vsel %vm1696, %v1681, 0.0
        %v1733 = vsel %vm1696, %v1683, 0.0
        %v1734 = vadd.f32 %v1732, %v1733
        %v1735 = vsel %vm1696, %v1685, 0.0
        %v1736 = vadd.f32 %v1734, %v1735
        %v1737 = vsel %vm1696, %v1687, 0.0
        %v1738 = vadd.f32 %v1736, %v1737
        %v1739 = vsel %vm1696, %v1688, 0.0
        %v1740 = vsel %vm1696, %v1690, 0.0
        %v1741 = vadd.f32 %v1739, %v1740
        %v1742 = vsel %vm1696, %v1692, 0.0
        %v1743 = vadd.f32 %v1741, %v1742
        %v1744 = vsel %vm1696, %v1694, 0.0
        %v1745 = vadd.f32 %v1743, %v1744
        %v1746 = vsel %vm1696, %v1689, 0.0
        %v1747 = vsel %vm1696, %v1691, 0.0
        %v1748 = vadd.f32 %v1746, %v1747
        %v1749 = vsel %vm1696, %v1693, 0.0
        %v1750 = vadd.f32 %v1748, %v1749
        %v1751 = vsel %vm1696, %v1695, 0.0
        %v1752 = vadd.f32 %v1750, %v1751
        %v1753 = vadd.f32 %v1703, 1e-07
        %v1754 = vadd.f32 %v1710, 1e-07
        %v1755 = vadd.f32 %v1717, 1e-07
        %v1756 = vadd.f32 %v1724, 1e-07
        %v1757 = vadd.f32 %v1731, 1e-07
        %v1758 = vadd.f32 %v1738, 1e-07
        %v1759 = vadd.f32 %v1745, 1e-07
        %v1760 = vadd.f32 %v1752, 1e-07
        %v1761 = vrcp.pop %v1753
        %v1762 = vrcp.pop %v1754
        %v1763 = vrcp.pop %v1755
        %v1764 = vrcp.pop %v1756
        %v1765 = vrcp.pop %v1757
        %v1766 = vrcp.pop %v1758
        %v1767 = vrcp.pop %v1759
        %v1768 = vrcp.pop %v1760
        %v1769 = vmul.f32 %v1632, %v1761
        %v1770 = vmul.f32 %v1633, %v1762
        %v1771 = vmul.f32 %v1634, %v1761
        %v1772 = vmul.f32 %v1635, %v1762
        %v1773 = vmul.f32 %v1636, %v1761
        %v1774 = vmul.f32 %v1637, %v1762
        %v1775 = vmul.f32 %v1638, %v1761
        %v1776 = vmul.f32 %v1639, %v1762
        %v1777 = vmul.f32 %v1640, %v1763
        %v1778 = vmul.f32 %v1641, %v1764
        %v1779 = vmul.f32 %v1642, %v1763
        %v1780 = vmul.f32 %v1643, %v1764
        %v1781 = vmul.f32 %v1644, %v1763
        %v1782 = vmul.f32 %v1645, %v1764
        %v1783 = vmul.f32 %v1646, %v1763
        %v1784 = vmul.f32 %v1647, %v1764
        %v1785 = vmul.f32 %v1648, %v1765
        %v1786 = vmul.f32 %v1649, %v1766
        %v1787 = vmul.f32 %v1650, %v1765
        %v1788 = vmul.f32 %v1651, %v1766
        %v1789 = vmul.f32 %v1652, %v1765
        %v1790 = vmul.f32 %v1653, %v1766
        %v1791 = vmul.f32 %v1654, %v1765
        %v1792 = vmul.f32 %v1655, %v1766
        %v1793 = vmul.f32 %v1656, %v1767
        %v1794 = vmul.f32 %v1657, %v1768
        %v1795 = vmul.f32 %v1658, %v1767
        %v1796 = vmul.f32 %v1659, %v1768
        %v1797 = vmul.f32 %v1660, %v1767
        %v1798 = vmul.f32 %v1661, %v1768
        %v1799 = vmul.f32 %v1662, %v1767
        %v1800 = vmul.f32 %v1663, %v1768
        %v1801 = vpack.c.bf16 %v237, %v237
        %v1802 = vpack.c.bf16 %v238, %v238
        %v1803 = vpack.c.bf16 %v239, %v239
        %v1804 = vpack.c.bf16 %v240, %v240
        %v1805 = vpack.c.bf16 %v241, %v241
        %v1806 = vpack.c.bf16 %v242, %v242
        %v1807 = vpack.c.bf16 %v243, %v243
        %v1808 = vpack.c.bf16 %v244, %v244
        %v1809 = vpack.c.bf16 %v245, %v245
        %v1810 = vpack.c.bf16 %v246, %v246
        %v1811 = vpack.c.bf16 %v247, %v247
        %v1812 = vpack.c.bf16 %v248, %v248
        %v1813 = vpack.c.bf16 %v249, %v249
        %v1814 = vpack.c.bf16 %v250, %v250
        %v1815 = vpack.c.bf16 %v251, %v251
        %v1816 = vpack.c.bf16 %v252, %v252
        %v1817 = vpack.c.bf16 %v253, %v253
        %v1818 = vpack.c.bf16 %v254, %v254
        %v1819 = vpack.c.bf16 %v255, %v255
        %v1820 = vpack.c.bf16 %v256, %v256
        %v1821 = vpack.c.bf16 %v257, %v257
        %v1822 = vpack.c.bf16 %v258, %v258
        %v1823 = vpack.c.bf16 %v259, %v259
        %v1824 = vpack.c.bf16 %v260, %v260
        %v1825 = vpack.c.bf16 %v1770, %v1769
        %v1826 = vpack.c.bf16 %v1778, %v1777
        %v1827 = vpack.c.bf16 %v1786, %v1785
        %v1828 = vpack.c.bf16 %v1794, %v1793
        %v1835 = vunpack.c.l.b16 %v1801
        %v1836 = vunpack.c.l.b16 %v1802
        %v1837 = vunpack.c.l.b16 %v1803
        %v1838 = vunpack.c.l.b16 %v1804
        %v1839 = vunpack.c.l.b16 %v1805
        %v1840 = vunpack.c.l.b16 %v1806
        %v1841 = vrot.slane %v1836, 7
        %v1842 = vsel %vm308, %v1841, %v1835
        %v1843 = vrot.slane %v1837, 6
        %v1844 = vsel %vm310, %v1843, %v1842
        %v1845 = vrot.slane %v1838, 5
        %v1846 = vsel %vm312, %v1845, %v1844
        %v1847 = vrot.slane %v1839, 4
        %v1848 = vsel %vm508, %v1847, %v1846
        %v1849 = vrot.slane %v1840, 3
        %vm1850 = vcmask 1045509
        %v1851 = vsel %vm1850, %v1849, %v1848
        %v1852 = vpack.c.b16 %v1851, %v1851
        %v1854 = vsel %vm1696, %v1852, 0
        %v1857 = vsel %vm1696, %v1825, 0
        %1859 = vmatprep.subr.bf16.mxu0 0
        %1860 = vmatpush1.bf16.xpose.msra.mxu0 0
        %1861 = vmatprep.subr.bf16.mxu0 0
        %1862 = vmatpush1.bf16.xpose.msra.mxu0 0
        %1863 = vmatprep.subr.bf16.mxu0 0
        %1864 = vmatpush1.bf16.xpose.msra.mxu0 0
        %1865 = vmatprep.subr.bf16.mxu0 0
        %1866 = vmatpush1.bf16.xpose.msra.mxu0 0
        %1867 = vmatprep.subr.bf16.mxu0 0
        %1868 = vmatpush1.bf16.xpose.msra.mxu0 0
        %1869 = vmatprep.subr.bf16.mxu0 0
        %1870 = vmatpush1.bf16.xpose.msra.mxu0 0
        %1871 = vmatprep.subr.bf16.mxu0 0
        %1872 = vmatpush1.bf16.xpose.msra.mxu0 0
        %1873 = vmatprep.subr.bf16.mxu0 0
        %1874 = vmatpush1.bf16.xpose.msra.mxu0 %v1857
        %1875 = vmatprep.subr.bf16.mxu0 0
        %1876 = vmatpush2.bf16.xpose.msra.mxu0 0
        %1877 = vmatprep.subr.bf16.mxu0 0
        %1878 = vmatpush2.bf16.xpose.msra.mxu0 0
        %1879 = vmatprep.subr.bf16.mxu0 0
        %1880 = vmatpush2.bf16.xpose.msra.mxu0 0
        %1881 = vmatprep.subr.bf16.mxu0 0
        %1882 = vmatpush2.bf16.xpose.msra.mxu0 0
        %1883 = vmatprep.subr.bf16.mxu0 0
        %1884 = vmatpush2.bf16.xpose.msra.mxu0 0
        %1885 = vmatprep.subr.bf16.mxu0 0
        %1886 = vmatpush2.bf16.xpose.msra.mxu0 0
        %1887 = vmatprep.subr.bf16.mxu0 0
        %1888 = vmatpush2.bf16.xpose.msra.mxu0 0
        %1889 = vmatprep.subr.bf16.mxu0 0
        %1890 = vmatpush2.bf16.xpose.msra.mxu0 0
        %1891 = vmatprep.mubr.bf16.mxu0 0
        %1892 = vmatmul.mubr.bf16.gmra.mxu0 %v1854
        %v1893 = vpop.f32.mrf.mxu0
        %v1894 = vadd.f32 0.0, %v1893
        %v1895 = vpop.f32.mrf.mxu0
        %v1896 = vpop.f32.mrf.mxu0
        %v1897 = vpop.f32.mrf.mxu0
        %1898 = vdwg.mxu0
        %v1905 = vunpack.c.l.b16 %v1807
        %v1906 = vunpack.c.l.b16 %v1808
        %v1907 = vunpack.c.l.b16 %v1809
        %v1908 = vunpack.c.l.b16 %v1810
        %v1909 = vunpack.c.l.b16 %v1811
        %v1910 = vunpack.c.l.b16 %v1812
        %v1911 = vrot.slane %v1906, 7
        %v1912 = vsel %vm308, %v1911, %v1905
        %v1913 = vrot.slane %v1907, 6
        %v1914 = vsel %vm310, %v1913, %v1912
        %v1915 = vrot.slane %v1908, 5
        %v1916 = vsel %vm312, %v1915, %v1914
        %v1917 = vrot.slane %v1909, 4
        %v1918 = vsel %vm508, %v1917, %v1916
        %v1919 = vrot.slane %v1910, 3
        %v1920 = vsel %vm1850, %v1919, %v1918
        %v1921 = vpack.c.b16 %v1920, %v1920
        %v1923 = vsel %vm1696, %v1921, 0
        %v1926 = vsel %vm1696, %v1826, 0
        %1928 = vmatprep.subr.bf16.mxu0 0
        %1929 = vmatpush1.bf16.xpose.msra.mxu0 0
        %1930 = vmatprep.subr.bf16.mxu0 0
        %1931 = vmatpush1.bf16.xpose.msra.mxu0 0
        %1932 = vmatprep.subr.bf16.mxu0 0
        %1933 = vmatpush1.bf16.xpose.msra.mxu0 0
        %1934 = vmatprep.subr.bf16.mxu0 0
        %1935 = vmatpush1.bf16.xpose.msra.mxu0 0
        %1936 = vmatprep.subr.bf16.mxu0 0
        %1937 = vmatpush1.bf16.xpose.msra.mxu0 0
        %1938 = vmatprep.subr.bf16.mxu0 0
        %1939 = vmatpush1.bf16.xpose.msra.mxu0 0
        %1940 = vmatprep.subr.bf16.mxu0 0
        %1941 = vmatpush1.bf16.xpose.msra.mxu0 0
        %1942 = vmatprep.subr.bf16.mxu0 0
        %1943 = vmatpush1.bf16.xpose.msra.mxu0 %v1926
        %1944 = vmatprep.subr.bf16.mxu0 0
        %1945 = vmatpush2.bf16.xpose.msra.mxu0 0
        %1946 = vmatprep.subr.bf16.mxu0 0
        %1947 = vmatpush2.bf16.xpose.msra.mxu0 0
        %1948 = vmatprep.subr.bf16.mxu0 0
        %1949 = vmatpush2.bf16.xpose.msra.mxu0 0
        %1950 = vmatprep.subr.bf16.mxu0 0
        %1951 = vmatpush2.bf16.xpose.msra.mxu0 0
        %1952 = vmatprep.subr.bf16.mxu0 0
        %1953 = vmatpush2.bf16.xpose.msra.mxu0 0
        %1954 = vmatprep.subr.bf16.mxu0 0
        %1955 = vmatpush2.bf16.xpose.msra.mxu0 0
        %1956 = vmatprep.subr.bf16.mxu0 0
        %1957 = vmatpush2.bf16.xpose.msra.mxu0 0
        %1958 = vmatprep.subr.bf16.mxu0 0
        %1959 = vmatpush2.bf16.xpose.msra.mxu0 0
        %1960 = vmatprep.mubr.bf16.mxu0 0
        %1961 = vmatmul.mubr.bf16.gmra.mxu0 %v1923
        %v1962 = vpop.f32.mrf.mxu0
        %v1963 = vadd.f32 0.0, %v1962
        %v1964 = vpop.f32.mrf.mxu0
        %v1965 = vpop.f32.mrf.mxu0
        %v1966 = vpop.f32.mrf.mxu0
        %1967 = vdwg.mxu0
        %v1974 = vunpack.c.l.b16 %v1813
        %v1975 = vunpack.c.l.b16 %v1814
        %v1976 = vunpack.c.l.b16 %v1815
        %v1977 = vunpack.c.l.b16 %v1816
        %v1978 = vunpack.c.l.b16 %v1817
        %v1979 = vunpack.c.l.b16 %v1818
        %v1980 = vrot.slane %v1975, 7
        %v1981 = vsel %vm308, %v1980, %v1974
        %v1982 = vrot.slane %v1976, 6
        %v1983 = vsel %vm310, %v1982, %v1981
        %v1984 = vrot.slane %v1977, 5
        %v1985 = vsel %vm312, %v1984, %v1983
        %v1986 = vrot.slane %v1978, 4
        %v1987 = vsel %vm508, %v1986, %v1985
        %v1988 = vrot.slane %v1979, 3
        %v1989 = vsel %vm1850, %v1988, %v1987
        %v1990 = vpack.c.b16 %v1989, %v1989
        %v1992 = vsel %vm1696, %v1990, 0
        %v1995 = vsel %vm1696, %v1827, 0
        %1997 = vmatprep.subr.bf16.mxu0 0
        %1998 = vmatpush1.bf16.xpose.msra.mxu0 0
        %1999 = vmatprep.subr.bf16.mxu0 0
        %2000 = vmatpush1.bf16.xpose.msra.mxu0 0
        %2001 = vmatprep.subr.bf16.mxu0 0
        %2002 = vmatpush1.bf16.xpose.msra.mxu0 0
        %2003 = vmatprep.subr.bf16.mxu0 0
        %2004 = vmatpush1.bf16.xpose.msra.mxu0 0
        %2005 = vmatprep.subr.bf16.mxu0 0
        %2006 = vmatpush1.bf16.xpose.msra.mxu0 0
        %2007 = vmatprep.subr.bf16.mxu0 0
        %2008 = vmatpush1.bf16.xpose.msra.mxu0 0
        %2009 = vmatprep.subr.bf16.mxu0 0
        %2010 = vmatpush1.bf16.xpose.msra.mxu0 0
        %2011 = vmatprep.subr.bf16.mxu0 0
        %2012 = vmatpush1.bf16.xpose.msra.mxu0 %v1995
        %2013 = vmatprep.subr.bf16.mxu0 0
        %2014 = vmatpush2.bf16.xpose.msra.mxu0 0
        %2015 = vmatprep.subr.bf16.mxu0 0
        %2016 = vmatpush2.bf16.xpose.msra.mxu0 0
        %2017 = vmatprep.subr.bf16.mxu0 0
        %2018 = vmatpush2.bf16.xpose.msra.mxu0 0
        %2019 = vmatprep.subr.bf16.mxu0 0
        %2020 = vmatpush2.bf16.xpose.msra.mxu0 0
        %2021 = vmatprep.subr.bf16.mxu0 0
        %2022 = vmatpush2.bf16.xpose.msra.mxu0 0
        %2023 = vmatprep.subr.bf16.mxu0 0
        %2024 = vmatpush2.bf16.xpose.msra.mxu0 0
        %2025 = vmatprep.subr.bf16.mxu0 0
        %2026 = vmatpush2.bf16.xpose.msra.mxu0 0
        %2027 = vmatprep.subr.bf16.mxu0 0
        %2028 = vmatpush2.bf16.xpose.msra.mxu0 0
        %2029 = vmatprep.mubr.bf16.mxu0 0
        %2030 = vmatmul.mubr.bf16.gmra.mxu0 %v1992
        %v2031 = vpop.f32.mrf.mxu0
        %v2032 = vadd.f32 0.0, %v2031
        %v2033 = vpop.f32.mrf.mxu0
        %v2034 = vpop.f32.mrf.mxu0
        %v2035 = vpop.f32.mrf.mxu0
        %2036 = vdwg.mxu0
        %v2043 = vunpack.c.l.b16 %v1819
        %v2044 = vunpack.c.l.b16 %v1820
        %v2045 = vunpack.c.l.b16 %v1821
        %v2046 = vunpack.c.l.b16 %v1822
        %v2047 = vunpack.c.l.b16 %v1823
        %v2048 = vunpack.c.l.b16 %v1824
        %v2049 = vrot.slane %v2044, 7
        %v2050 = vsel %vm308, %v2049, %v2043
        %v2051 = vrot.slane %v2045, 6
        %v2052 = vsel %vm310, %v2051, %v2050
        %v2053 = vrot.slane %v2046, 5
        %v2054 = vsel %vm312, %v2053, %v2052
        %v2055 = vrot.slane %v2047, 4
        %v2056 = vsel %vm508, %v2055, %v2054
        %v2057 = vrot.slane %v2048, 3
        %v2058 = vsel %vm1850, %v2057, %v2056
        %v2059 = vpack.c.b16 %v2058, %v2058
        %v2061 = vsel %vm1696, %v2059, 0
        %v2064 = vsel %vm1696, %v1828, 0
        %2066 = vmatprep.subr.bf16.mxu0 0
        %2067 = vmatpush1.bf16.xpose.msra.mxu0 0
        %2068 = vmatprep.subr.bf16.mxu0 0
        %2069 = vmatpush1.bf16.xpose.msra.mxu0 0
        %2070 = vmatprep.subr.bf16.mxu0 0
        %2071 = vmatpush1.bf16.xpose.msra.mxu0 0
        %2072 = vmatprep.subr.bf16.mxu0 0
        %2073 = vmatpush1.bf16.xpose.msra.mxu0 0
        %2074 = vmatprep.subr.bf16.mxu0 0
        %2075 = vmatpush1.bf16.xpose.msra.mxu0 0
        %2076 = vmatprep.subr.bf16.mxu0 0
        %2077 = vmatpush1.bf16.xpose.msra.mxu0 0
        %2078 = vmatprep.subr.bf16.mxu0 0
        %2079 = vmatpush1.bf16.xpose.msra.mxu0 0
        %2080 = vmatprep.subr.bf16.mxu0 0
        %2081 = vmatpush1.bf16.xpose.msra.mxu0 %v2064
        %2082 = vmatprep.subr.bf16.mxu0 0
        %2083 = vmatpush2.bf16.xpose.msra.mxu0 0
        %2084 = vmatprep.subr.bf16.mxu0 0
        %2085 = vmatpush2.bf16.xpose.msra.mxu0 0
        %2086 = vmatprep.subr.bf16.mxu0 0
        %2087 = vmatpush2.bf16.xpose.msra.mxu0 0
        %2088 = vmatprep.subr.bf16.mxu0 0
        %2089 = vmatpush2.bf16.xpose.msra.mxu0 0
        %2090 = vmatprep.subr.bf16.mxu0 0
        %2091 = vmatpush2.bf16.xpose.msra.mxu0 0
        %2092 = vmatprep.subr.bf16.mxu0 0
        %2093 = vmatpush2.bf16.xpose.msra.mxu0 0
        %2094 = vmatprep.subr.bf16.mxu0 0
        %2095 = vmatpush2.bf16.xpose.msra.mxu0 0
        %2096 = vmatprep.subr.bf16.mxu0 0
        %2097 = vmatpush2.bf16.xpose.msra.mxu0 0
        %2098 = vmatprep.mubr.bf16.mxu0 0
        %2099 = vmatmul.mubr.bf16.gmra.mxu0 %v2061
        %v2100 = vpop.f32.mrf.mxu0
        %v2101 = vadd.f32 0.0, %v2100
        %v2102 = vpop.f32.mrf.mxu0
        %v2103 = vpop.f32.mrf.mxu0
        %v2104 = vpop.f32.mrf.mxu0
        %2105 = vdwg.mxu0
        %v2106 = vpack.c.bf16 %v1772, %v1771
        %v2107 = vpack.c.bf16 %v1780, %v1779
        %v2108 = vpack.c.bf16 %v1788, %v1787
        %v2109 = vpack.c.bf16 %v1796, %v1795
        %v2110 = vrot.slane %v1835, 1
        %v2111 = vsel %vm308, %v1836, %v2110
        %v2112 = vrot.slane %v1837, 7
        %v2113 = vsel %vm310, %v2112, %v2111
        %v2114 = vrot.slane %v1838, 6
        %v2115 = vsel %vm312, %v2114, %v2113
        %v2116 = vrot.slane %v1839, 5
        %v2117 = vsel %vm508, %v2116, %v2115
        %v2118 = vrot.slane %v1840, 4
        %v2119 = vsel %vm1850, %v2118, %v2117
        %v2120 = vpack.c.b16 %v2119, %v2119
        %v2122 = vsel %vm1696, %v2120, 0
        %v2125 = vsel %vm1696, %v2106, 0
        %2127 = vmatprep.subr.bf16.mxu0 0
        %2128 = vmatpush1.bf16.xpose.msra.mxu0 0
        %2129 = vmatprep.subr.bf16.mxu0 0
        %2130 = vmatpush1.bf16.xpose.msra.mxu0 0
        %2131 = vmatprep.subr.bf16.mxu0 0
        %2132 = vmatpush1.bf16.xpose.msra.mxu0 0
        %2133 = vmatprep.subr.bf16.mxu0 0
        %2134 = vmatpush1.bf16.xpose.msra.mxu0 0
        %2135 = vmatprep.subr.bf16.mxu0 0
        %2136 = vmatpush1.bf16.xpose.msra.mxu0 0
        %2137 = vmatprep.subr.bf16.mxu0 0
        %2138 = vmatpush1.bf16.xpose.msra.mxu0 0
        %2139 = vmatprep.subr.bf16.mxu0 0
        %2140 = vmatpush1.bf16.xpose.msra.mxu0 0
        %2141 = vmatprep.subr.bf16.mxu0 0
        %2142 = vmatpush1.bf16.xpose.msra.mxu0 %v2125
        %2143 = vmatprep.subr.bf16.mxu0 0
        %2144 = vmatpush2.bf16.xpose.msra.mxu0 0
        %2145 = vmatprep.subr.bf16.mxu0 0
        %2146 = vmatpush2.bf16.xpose.msra.mxu0 0
        %2147 = vmatprep.subr.bf16.mxu0 0
        %2148 = vmatpush2.bf16.xpose.msra.mxu0 0
        %2149 = vmatprep.subr.bf16.mxu0 0
        %2150 = vmatpush2.bf16.xpose.msra.mxu0 0
        %2151 = vmatprep.subr.bf16.mxu0 0
        %2152 = vmatpush2.bf16.xpose.msra.mxu0 0
        %2153 = vmatprep.subr.bf16.mxu0 0
        %2154 = vmatpush2.bf16.xpose.msra.mxu0 0
        %2155 = vmatprep.subr.bf16.mxu0 0
        %2156 = vmatpush2.bf16.xpose.msra.mxu0 0
        %2157 = vmatprep.subr.bf16.mxu0 0
        %2158 = vmatpush2.bf16.xpose.msra.mxu0 0
        %2159 = vmatprep.mubr.bf16.mxu0 0
        %2160 = vmatmul.mubr.bf16.gmra.mxu0 %v2122
        %v2161 = vpop.f32.mrf.mxu0
        %v2162 = vadd.f32 0.0, %v2161
        %v2163 = vpop.f32.mrf.mxu0
        %v2164 = vpop.f32.mrf.mxu0
        %v2165 = vpop.f32.mrf.mxu0
        %2166 = vdwg.mxu0
        %v2167 = vrot.slane %v1905, 1
        %v2168 = vsel %vm308, %v1906, %v2167
        %v2169 = vrot.slane %v1907, 7
        %v2170 = vsel %vm310, %v2169, %v2168
        %v2171 = vrot.slane %v1908, 6
        %v2172 = vsel %vm312, %v2171, %v2170
        %v2173 = vrot.slane %v1909, 5
        %v2174 = vsel %vm508, %v2173, %v2172
        %v2175 = vrot.slane %v1910, 4
        %v2176 = vsel %vm1850, %v2175, %v2174
        %v2177 = vpack.c.b16 %v2176, %v2176
        %v2179 = vsel %vm1696, %v2177, 0
        %v2182 = vsel %vm1696, %v2107, 0
        %2184 = vmatprep.subr.bf16.mxu0 0
        %2185 = vmatpush1.bf16.xpose.msra.mxu0 0
        %2186 = vmatprep.subr.bf16.mxu0 0
        %2187 = vmatpush1.bf16.xpose.msra.mxu0 0
        %2188 = vmatprep.subr.bf16.mxu0 0
        %2189 = vmatpush1.bf16.xpose.msra.mxu0 0
        %2190 = vmatprep.subr.bf16.mxu0 0
        %2191 = vmatpush1.bf16.xpose.msra.mxu0 0
        %2192 = vmatprep.subr.bf16.mxu0 0
        %2193 = vmatpush1.bf16.xpose.msra.mxu0 0
        %2194 = vmatprep.subr.bf16.mxu0 0
        %2195 = vmatpush1.bf16.xpose.msra.mxu0 0
        %2196 = vmatprep.subr.bf16.mxu0 0
        %2197 = vmatpush1.bf16.xpose.msra.mxu0 0
        %2198 = vmatprep.subr.bf16.mxu0 0
        %2199 = vmatpush1.bf16.xpose.msra.mxu0 %v2182
        %2200 = vmatprep.subr.bf16.mxu0 0
        %2201 = vmatpush2.bf16.xpose.msra.mxu0 0
        %2202 = vmatprep.subr.bf16.mxu0 0
        %2203 = vmatpush2.bf16.xpose.msra.mxu0 0
        %2204 = vmatprep.subr.bf16.mxu0 0
        %2205 = vmatpush2.bf16.xpose.msra.mxu0 0
        %2206 = vmatprep.subr.bf16.mxu0 0
        %2207 = vmatpush2.bf16.xpose.msra.mxu0 0
        %2208 = vmatprep.subr.bf16.mxu0 0
        %2209 = vmatpush2.bf16.xpose.msra.mxu0 0
        %2210 = vmatprep.subr.bf16.mxu0 0
        %2211 = vmatpush2.bf16.xpose.msra.mxu0 0
        %2212 = vmatprep.subr.bf16.mxu0 0
        %2213 = vmatpush2.bf16.xpose.msra.mxu0 0
        %2214 = vmatprep.subr.bf16.mxu0 0
        %2215 = vmatpush2.bf16.xpose.msra.mxu0 0
        %2216 = vmatprep.mubr.bf16.mxu0 0
        %2217 = vmatmul.mubr.bf16.gmra.mxu0 %v2179
        %v2218 = vpop.f32.mrf.mxu0
        %v2219 = vadd.f32 0.0, %v2218
        %v2220 = vpop.f32.mrf.mxu0
        %v2221 = vpop.f32.mrf.mxu0
        %v2222 = vpop.f32.mrf.mxu0
        %2223 = vdwg.mxu0
        %v2224 = vrot.slane %v1974, 1
        %v2225 = vsel %vm308, %v1975, %v2224
        %v2226 = vrot.slane %v1976, 7
        %v2227 = vsel %vm310, %v2226, %v2225
        %v2228 = vrot.slane %v1977, 6
        %v2229 = vsel %vm312, %v2228, %v2227
        %v2230 = vrot.slane %v1978, 5
        %v2231 = vsel %vm508, %v2230, %v2229
        %v2232 = vrot.slane %v1979, 4
        %v2233 = vsel %vm1850, %v2232, %v2231
        %v2234 = vpack.c.b16 %v2233, %v2233
        %v2236 = vsel %vm1696, %v2234, 0
        %v2239 = vsel %vm1696, %v2108, 0
        %2241 = vmatprep.subr.bf16.mxu0 0
        %2242 = vmatpush1.bf16.xpose.msra.mxu0 0
        %2243 = vmatprep.subr.bf16.mxu0 0
        %2244 = vmatpush1.bf16.xpose.msra.mxu0 0
        %2245 = vmatprep.subr.bf16.mxu0 0
        %2246 = vmatpush1.bf16.xpose.msra.mxu0 0
        %2247 = vmatprep.subr.bf16.mxu0 0
        %2248 = vmatpush1.bf16.xpose.msra.mxu0 0
        %2249 = vmatprep.subr.bf16.mxu0 0
        %2250 = vmatpush1.bf16.xpose.msra.mxu0 0
        %2251 = vmatprep.subr.bf16.mxu0 0
        %2252 = vmatpush1.bf16.xpose.msra.mxu0 0
        %2253 = vmatprep.subr.bf16.mxu0 0
        %2254 = vmatpush1.bf16.xpose.msra.mxu0 0
        %2255 = vmatprep.subr.bf16.mxu0 0
        %2256 = vmatpush1.bf16.xpose.msra.mxu0 %v2239
        %2257 = vmatprep.subr.bf16.mxu0 0
        %2258 = vmatpush2.bf16.xpose.msra.mxu0 0
        %2259 = vmatprep.subr.bf16.mxu0 0
        %2260 = vmatpush2.bf16.xpose.msra.mxu0 0
        %2261 = vmatprep.subr.bf16.mxu0 0
        %2262 = vmatpush2.bf16.xpose.msra.mxu0 0
        %2263 = vmatprep.subr.bf16.mxu0 0
        %2264 = vmatpush2.bf16.xpose.msra.mxu0 0
        %2265 = vmatprep.subr.bf16.mxu0 0
        %2266 = vmatpush2.bf16.xpose.msra.mxu0 0
        %2267 = vmatprep.subr.bf16.mxu0 0
        %2268 = vmatpush2.bf16.xpose.msra.mxu0 0
        %2269 = vmatprep.subr.bf16.mxu0 0
        %2270 = vmatpush2.bf16.xpose.msra.mxu0 0
        %2271 = vmatprep.subr.bf16.mxu0 0
        %2272 = vmatpush2.bf16.xpose.msra.mxu0 0
        %2273 = vmatprep.mubr.bf16.mxu0 0
        %2274 = vmatmul.mubr.bf16.gmra.mxu0 %v2236
        %v2275 = vpop.f32.mrf.mxu0
        %v2276 = vadd.f32 0.0, %v2275
        %v2277 = vpop.f32.mrf.mxu0
        %v2278 = vpop.f32.mrf.mxu0
        %v2279 = vpop.f32.mrf.mxu0
        %2280 = vdwg.mxu0
        %v2281 = vrot.slane %v2043, 1
        %v2282 = vsel %vm308, %v2044, %v2281
        %v2283 = vrot.slane %v2045, 7
        %v2284 = vsel %vm310, %v2283, %v2282
        %v2285 = vrot.slane %v2046, 6
        %v2286 = vsel %vm312, %v2285, %v2284
        %v2287 = vrot.slane %v2047, 5
        %v2288 = vsel %vm508, %v2287, %v2286
        %v2289 = vrot.slane %v2048, 4
        %v2290 = vsel %vm1850, %v2289, %v2288
        %v2291 = vpack.c.b16 %v2290, %v2290
        %v2293 = vsel %vm1696, %v2291, 0
        %v2296 = vsel %vm1696, %v2109, 0
        %2298 = vmatprep.subr.bf16.mxu0 0
        %2299 = vmatpush1.bf16.xpose.msra.mxu0 0
        %2300 = vmatprep.subr.bf16.mxu0 0
        %2301 = vmatpush1.bf16.xpose.msra.mxu0 0
        %2302 = vmatprep.subr.bf16.mxu0 0
        %2303 = vmatpush1.bf16.xpose.msra.mxu0 0
        %2304 = vmatprep.subr.bf16.mxu0 0
        %2305 = vmatpush1.bf16.xpose.msra.mxu0 0
        %2306 = vmatprep.subr.bf16.mxu0 0
        %2307 = vmatpush1.bf16.xpose.msra.mxu0 0
        %2308 = vmatprep.subr.bf16.mxu0 0
        %2309 = vmatpush1.bf16.xpose.msra.mxu0 0
        %2310 = vmatprep.subr.bf16.mxu0 0
        %2311 = vmatpush1.bf16.xpose.msra.mxu0 0
        %2312 = vmatprep.subr.bf16.mxu0 0
        %2313 = vmatpush1.bf16.xpose.msra.mxu0 %v2296
        %2314 = vmatprep.subr.bf16.mxu0 0
        %2315 = vmatpush2.bf16.xpose.msra.mxu0 0
        %2316 = vmatprep.subr.bf16.mxu0 0
        %2317 = vmatpush2.bf16.xpose.msra.mxu0 0
        %2318 = vmatprep.subr.bf16.mxu0 0
        %2319 = vmatpush2.bf16.xpose.msra.mxu0 0
        %2320 = vmatprep.subr.bf16.mxu0 0
        %2321 = vmatpush2.bf16.xpose.msra.mxu0 0
        %2322 = vmatprep.subr.bf16.mxu0 0
        %2323 = vmatpush2.bf16.xpose.msra.mxu0 0
        %2324 = vmatprep.subr.bf16.mxu0 0
        %2325 = vmatpush2.bf16.xpose.msra.mxu0 0
        %2326 = vmatprep.subr.bf16.mxu0 0
        %2327 = vmatpush2.bf16.xpose.msra.mxu0 0
        %2328 = vmatprep.subr.bf16.mxu0 0
        %2329 = vmatpush2.bf16.xpose.msra.mxu0 0
        %2330 = vmatprep.mubr.bf16.mxu0 0
        %2331 = vmatmul.mubr.bf16.gmra.mxu0 %v2293
        %v2332 = vpop.f32.mrf.mxu0
        %v2333 = vadd.f32 0.0, %v2332
        %v2334 = vpop.f32.mrf.mxu0
        %v2335 = vpop.f32.mrf.mxu0
        %v2336 = vpop.f32.mrf.mxu0
        %2337 = vdwg.mxu0
        %v2338 = vpack.c.bf16 %v1774, %v1773
        %v2339 = vpack.c.bf16 %v1782, %v1781
        %v2340 = vpack.c.bf16 %v1790, %v1789
        %v2341 = vpack.c.bf16 %v1798, %v1797
        %v2342 = vrot.slane %v1835, 2
        %v2343 = vrot.slane %v1836, 1
        %v2344 = vsel %vm308, %v2343, %v2342
        %v2345 = vsel %vm310, %v1837, %v2344
        %v2346 = vrot.slane %v1838, 7
        %v2347 = vsel %vm312, %v2346, %v2345
        %v2348 = vrot.slane %v1839, 6
        %v2349 = vsel %vm508, %v2348, %v2347
        %v2350 = vrot.slane %v1840, 5
        %v2351 = vsel %vm1850, %v2350, %v2349
        %v2352 = vpack.c.b16 %v2351, %v2351
        %v2354 = vsel %vm1696, %v2352, 0
        %v2357 = vsel %vm1696, %v2338, 0
        %2359 = vmatprep.subr.bf16.mxu0 0
        %2360 = vmatpush1.bf16.xpose.msra.mxu0 0
        %2361 = vmatprep.subr.bf16.mxu0 0
        %2362 = vmatpush1.bf16.xpose.msra.mxu0 0
        %2363 = vmatprep.subr.bf16.mxu0 0
        %2364 = vmatpush1.bf16.xpose.msra.mxu0 0
        %2365 = vmatprep.subr.bf16.mxu0 0
        %2366 = vmatpush1.bf16.xpose.msra.mxu0 0
        %2367 = vmatprep.subr.bf16.mxu0 0
        %2368 = vmatpush1.bf16.xpose.msra.mxu0 0
        %2369 = vmatprep.subr.bf16.mxu0 0
        %2370 = vmatpush1.bf16.xpose.msra.mxu0 0
        %2371 = vmatprep.subr.bf16.mxu0 0
        %2372 = vmatpush1.bf16.xpose.msra.mxu0 0
        %2373 = vmatprep.subr.bf16.mxu0 0
        %2374 = vmatpush1.bf16.xpose.msra.mxu0 %v2357
        %2375 = vmatprep.subr.bf16.mxu0 0
        %2376 = vmatpush2.bf16.xpose.msra.mxu0 0
        %2377 = vmatprep.subr.bf16.mxu0 0
        %2378 = vmatpush2.bf16.xpose.msra.mxu0 0
        %2379 = vmatprep.subr.bf16.mxu0 0
        %2380 = vmatpush2.bf16.xpose.msra.mxu0 0
        %2381 = vmatprep.subr.bf16.mxu0 0
        %2382 = vmatpush2.bf16.xpose.msra.mxu0 0
        %2383 = vmatprep.subr.bf16.mxu0 0
        %2384 = vmatpush2.bf16.xpose.msra.mxu0 0
        %2385 = vmatprep.subr.bf16.mxu0 0
        %2386 = vmatpush2.bf16.xpose.msra.mxu0 0
        %2387 = vmatprep.subr.bf16.mxu0 0
        %2388 = vmatpush2.bf16.xpose.msra.mxu0 0
        %2389 = vmatprep.subr.bf16.mxu0 0
        %2390 = vmatpush2.bf16.xpose.msra.mxu0 0
        %2391 = vmatprep.mubr.bf16.mxu0 0
        %2392 = vmatmul.mubr.bf16.gmra.mxu0 %v2354
        %v2393 = vpop.f32.mrf.mxu0
        %v2394 = vadd.f32 0.0, %v2393
        %v2395 = vpop.f32.mrf.mxu0
        %v2396 = vpop.f32.mrf.mxu0
        %v2397 = vpop.f32.mrf.mxu0
        %2398 = vdwg.mxu0
        %v2399 = vrot.slane %v1905, 2
        %v2400 = vrot.slane %v1906, 1
        %v2401 = vsel %vm308, %v2400, %v2399
        %v2402 = vsel %vm310, %v1907, %v2401
        %v2403 = vrot.slane %v1908, 7
        %v2404 = vsel %vm312, %v2403, %v2402
        %v2405 = vrot.slane %v1909, 6
        %v2406 = vsel %vm508, %v2405, %v2404
        %v2407 = vrot.slane %v1910, 5
        %v2408 = vsel %vm1850, %v2407, %v2406
        %v2409 = vpack.c.b16 %v2408, %v2408
        %v2411 = vsel %vm1696, %v2409, 0
        %v2414 = vsel %vm1696, %v2339, 0
        %2416 = vmatprep.subr.bf16.mxu0 0
        %2417 = vmatpush1.bf16.xpose.msra.mxu0 0
        %2418 = vmatprep.subr.bf16.mxu0 0
        %2419 = vmatpush1.bf16.xpose.msra.mxu0 0
        %2420 = vmatprep.subr.bf16.mxu0 0
        %2421 = vmatpush1.bf16.xpose.msra.mxu0 0
        %2422 = vmatprep.subr.bf16.mxu0 0
        %2423 = vmatpush1.bf16.xpose.msra.mxu0 0
        %2424 = vmatprep.subr.bf16.mxu0 0
        %2425 = vmatpush1.bf16.xpose.msra.mxu0 0
        %2426 = vmatprep.subr.bf16.mxu0 0
        %2427 = vmatpush1.bf16.xpose.msra.mxu0 0
        %2428 = vmatprep.subr.bf16.mxu0 0
        %2429 = vmatpush1.bf16.xpose.msra.mxu0 0
        %2430 = vmatprep.subr.bf16.mxu0 0
        %2431 = vmatpush1.bf16.xpose.msra.mxu0 %v2414
        %2432 = vmatprep.subr.bf16.mxu0 0
        %2433 = vmatpush2.bf16.xpose.msra.mxu0 0
        %2434 = vmatprep.subr.bf16.mxu0 0
        %2435 = vmatpush2.bf16.xpose.msra.mxu0 0
        %2436 = vmatprep.subr.bf16.mxu0 0
        %2437 = vmatpush2.bf16.xpose.msra.mxu0 0
        %2438 = vmatprep.subr.bf16.mxu0 0
        %2439 = vmatpush2.bf16.xpose.msra.mxu0 0
        %2440 = vmatprep.subr.bf16.mxu0 0
        %2441 = vmatpush2.bf16.xpose.msra.mxu0 0
        %2442 = vmatprep.subr.bf16.mxu0 0
        %2443 = vmatpush2.bf16.xpose.msra.mxu0 0
        %2444 = vmatprep.subr.bf16.mxu0 0
        %2445 = vmatpush2.bf16.xpose.msra.mxu0 0
        %2446 = vmatprep.subr.bf16.mxu0 0
        %2447 = vmatpush2.bf16.xpose.msra.mxu0 0
        %2448 = vmatprep.mubr.bf16.mxu0 0
        %2449 = vmatmul.mubr.bf16.gmra.mxu0 %v2411
        %v2450 = vpop.f32.mrf.mxu0
        %v2451 = vadd.f32 0.0, %v2450
        %v2452 = vpop.f32.mrf.mxu0
        %v2453 = vpop.f32.mrf.mxu0
        %v2454 = vpop.f32.mrf.mxu0
        %2455 = vdwg.mxu0
        %v2456 = vrot.slane %v1974, 2
        %v2457 = vrot.slane %v1975, 1
        %v2458 = vsel %vm308, %v2457, %v2456
        %v2459 = vsel %vm310, %v1976, %v2458
        %v2460 = vrot.slane %v1977, 7
        %v2461 = vsel %vm312, %v2460, %v2459
        %v2462 = vrot.slane %v1978, 6
        %v2463 = vsel %vm508, %v2462, %v2461
        %v2464 = vrot.slane %v1979, 5
        %v2465 = vsel %vm1850, %v2464, %v2463
        %v2466 = vpack.c.b16 %v2465, %v2465
        %v2468 = vsel %vm1696, %v2466, 0
        %v2471 = vsel %vm1696, %v2340, 0
        %2473 = vmatprep.subr.bf16.mxu0 0
        %2474 = vmatpush1.bf16.xpose.msra.mxu0 0
        %2475 = vmatprep.subr.bf16.mxu0 0
        %2476 = vmatpush1.bf16.xpose.msra.mxu0 0
        %2477 = vmatprep.subr.bf16.mxu0 0
        %2478 = vmatpush1.bf16.xpose.msra.mxu0 0
        %2479 = vmatprep.subr.bf16.mxu0 0
        %2480 = vmatpush1.bf16.xpose.msra.mxu0 0
        %2481 = vmatprep.subr.bf16.mxu0 0
        %2482 = vmatpush1.bf16.xpose.msra.mxu0 0
        %2483 = vmatprep.subr.bf16.mxu0 0
        %2484 = vmatpush1.bf16.xpose.msra.mxu0 0
        %2485 = vmatprep.subr.bf16.mxu0 0
        %2486 = vmatpush1.bf16.xpose.msra.mxu0 0
        %2487 = vmatprep.subr.bf16.mxu0 0
        %2488 = vmatpush1.bf16.xpose.msra.mxu0 %v2471
        %2489 = vmatprep.subr.bf16.mxu0 0
        %2490 = vmatpush2.bf16.xpose.msra.mxu0 0
        %2491 = vmatprep.subr.bf16.mxu0 0
        %2492 = vmatpush2.bf16.xpose.msra.mxu0 0
        %2493 = vmatprep.subr.bf16.mxu0 0
        %2494 = vmatpush2.bf16.xpose.msra.mxu0 0
        %2495 = vmatprep.subr.bf16.mxu0 0
        %2496 = vmatpush2.bf16.xpose.msra.mxu0 0
        %2497 = vmatprep.subr.bf16.mxu0 0
        %2498 = vmatpush2.bf16.xpose.msra.mxu0 0
        %2499 = vmatprep.subr.bf16.mxu0 0
        %2500 = vmatpush2.bf16.xpose.msra.mxu0 0
        %2501 = vmatprep.subr.bf16.mxu0 0
        %2502 = vmatpush2.bf16.xpose.msra.mxu0 0
        %2503 = vmatprep.subr.bf16.mxu0 0
        %2504 = vmatpush2.bf16.xpose.msra.mxu0 0
        %2505 = vmatprep.mubr.bf16.mxu0 0
        %2506 = vmatmul.mubr.bf16.gmra.mxu0 %v2468
        %v2507 = vpop.f32.mrf.mxu0
        %v2508 = vadd.f32 0.0, %v2507
        %v2509 = vpop.f32.mrf.mxu0
        %v2510 = vpop.f32.mrf.mxu0
        %v2511 = vpop.f32.mrf.mxu0
        %2512 = vdwg.mxu0
        %v2513 = vrot.slane %v2043, 2
        %v2514 = vrot.slane %v2044, 1
        %v2515 = vsel %vm308, %v2514, %v2513
        %v2516 = vsel %vm310, %v2045, %v2515
        %v2517 = vrot.slane %v2046, 7
        %v2518 = vsel %vm312, %v2517, %v2516
        %v2519 = vrot.slane %v2047, 6
        %v2520 = vsel %vm508, %v2519, %v2518
        %v2521 = vrot.slane %v2048, 5
        %v2522 = vsel %vm1850, %v2521, %v2520
        %v2523 = vpack.c.b16 %v2522, %v2522
        %v2525 = vsel %vm1696, %v2523, 0
        %v2528 = vsel %vm1696, %v2341, 0
        %2530 = vmatprep.subr.bf16.mxu0 0
        %2531 = vmatpush1.bf16.xpose.msra.mxu0 0
        %2532 = vmatprep.subr.bf16.mxu0 0
        %2533 = vmatpush1.bf16.xpose.msra.mxu0 0
        %2534 = vmatprep.subr.bf16.mxu0 0
        %2535 = vmatpush1.bf16.xpose.msra.mxu0 0
        %2536 = vmatprep.subr.bf16.mxu0 0
        %2537 = vmatpush1.bf16.xpose.msra.mxu0 0
        %2538 = vmatprep.subr.bf16.mxu0 0
        %2539 = vmatpush1.bf16.xpose.msra.mxu0 0
        %2540 = vmatprep.subr.bf16.mxu0 0
        %2541 = vmatpush1.bf16.xpose.msra.mxu0 0
        %2542 = vmatprep.subr.bf16.mxu0 0
        %2543 = vmatpush1.bf16.xpose.msra.mxu0 0
        %2544 = vmatprep.subr.bf16.mxu0 0
        %2545 = vmatpush1.bf16.xpose.msra.mxu0 %v2528
        %2546 = vmatprep.subr.bf16.mxu0 0
        %2547 = vmatpush2.bf16.xpose.msra.mxu0 0
        %2548 = vmatprep.subr.bf16.mxu0 0
        %2549 = vmatpush2.bf16.xpose.msra.mxu0 0
        %2550 = vmatprep.subr.bf16.mxu0 0
        %2551 = vmatpush2.bf16.xpose.msra.mxu0 0
        %2552 = vmatprep.subr.bf16.mxu0 0
        %2553 = vmatpush2.bf16.xpose.msra.mxu0 0
        %2554 = vmatprep.subr.bf16.mxu0 0
        %2555 = vmatpush2.bf16.xpose.msra.mxu0 0
        %2556 = vmatprep.subr.bf16.mxu0 0
        %2557 = vmatpush2.bf16.xpose.msra.mxu0 0
        %2558 = vmatprep.subr.bf16.mxu0 0
        %2559 = vmatpush2.bf16.xpose.msra.mxu0 0
        %2560 = vmatprep.subr.bf16.mxu0 0
        %2561 = vmatpush2.bf16.xpose.msra.mxu0 0
        %2562 = vmatprep.mubr.bf16.mxu0 0
        %2563 = vmatmul.mubr.bf16.gmra.mxu0 %v2525
        %v2564 = vpop.f32.mrf.mxu0
        %v2565 = vadd.f32 0.0, %v2564
        %v2566 = vpop.f32.mrf.mxu0
        %v2567 = vpop.f32.mrf.mxu0
        %v2568 = vpop.f32.mrf.mxu0
        %2569 = vdwg.mxu0
        %v2570 = vpack.c.bf16 %v1776, %v1775
        %v2571 = vpack.c.bf16 %v1784, %v1783
        %v2572 = vpack.c.bf16 %v1792, %v1791
        %v2573 = vpack.c.bf16 %v1800, %v1799
        %v2574 = vrot.slane %v1835, 3
        %v2575 = vrot.slane %v1836, 2
        %v2576 = vsel %vm308, %v2575, %v2574
        %v2577 = vrot.slane %v1837, 1
        %v2578 = vsel %vm310, %v2577, %v2576
        %v2579 = vsel %vm312, %v1838, %v2578
        %v2580 = vrot.slane %v1839, 7
        %v2581 = vsel %vm508, %v2580, %v2579
        %v2582 = vrot.slane %v1840, 6
        %v2583 = vsel %vm1850, %v2582, %v2581
        %v2584 = vpack.c.b16 %v2583, %v2583
        %v2586 = vsel %vm1696, %v2584, 0
        %v2589 = vsel %vm1696, %v2570, 0
        %2591 = vmatprep.subr.bf16.mxu0 0
        %2592 = vmatpush1.bf16.xpose.msra.mxu0 0
        %2593 = vmatprep.subr.bf16.mxu0 0
        %2594 = vmatpush1.bf16.xpose.msra.mxu0 0
        %2595 = vmatprep.subr.bf16.mxu0 0
        %2596 = vmatpush1.bf16.xpose.msra.mxu0 0
        %2597 = vmatprep.subr.bf16.mxu0 0
        %2598 = vmatpush1.bf16.xpose.msra.mxu0 0
        %2599 = vmatprep.subr.bf16.mxu0 0
        %2600 = vmatpush1.bf16.xpose.msra.mxu0 0
        %2601 = vmatprep.subr.bf16.mxu0 0
        %2602 = vmatpush1.bf16.xpose.msra.mxu0 0
        %2603 = vmatprep.subr.bf16.mxu0 0
        %2604 = vmatpush1.bf16.xpose.msra.mxu0 0
        %2605 = vmatprep.subr.bf16.mxu0 0
        %2606 = vmatpush1.bf16.xpose.msra.mxu0 %v2589
        %2607 = vmatprep.subr.bf16.mxu0 0
        %2608 = vmatpush2.bf16.xpose.msra.mxu0 0
        %2609 = vmatprep.subr.bf16.mxu0 0
        %2610 = vmatpush2.bf16.xpose.msra.mxu0 0
        %2611 = vmatprep.subr.bf16.mxu0 0
        %2612 = vmatpush2.bf16.xpose.msra.mxu0 0
        %2613 = vmatprep.subr.bf16.mxu0 0
        %2614 = vmatpush2.bf16.xpose.msra.mxu0 0
        %2615 = vmatprep.subr.bf16.mxu0 0
        %2616 = vmatpush2.bf16.xpose.msra.mxu0 0
        %2617 = vmatprep.subr.bf16.mxu0 0
        %2618 = vmatpush2.bf16.xpose.msra.mxu0 0
        %2619 = vmatprep.subr.bf16.mxu0 0
        %2620 = vmatpush2.bf16.xpose.msra.mxu0 0
        %2621 = vmatprep.subr.bf16.mxu0 0
        %2622 = vmatpush2.bf16.xpose.msra.mxu0 0
        %2623 = vmatprep.mubr.bf16.mxu0 0
        %2624 = vmatmul.mubr.bf16.gmra.mxu0 %v2586
        %v2625 = vpop.f32.mrf.mxu0
        %v2626 = vadd.f32 0.0, %v2625
        %v2627 = vpop.f32.mrf.mxu0
        %v2628 = vpop.f32.mrf.mxu0
        %v2629 = vpop.f32.mrf.mxu0
        %2630 = vdwg.mxu0
        %v2631 = vrot.slane %v1905, 3
        %v2632 = vrot.slane %v1906, 2
        %v2633 = vsel %vm308, %v2632, %v2631
        %v2634 = vrot.slane %v1907, 1
        %v2635 = vsel %vm310, %v2634, %v2633
        %v2636 = vsel %vm312, %v1908, %v2635
        %v2637 = vrot.slane %v1909, 7
        %v2638 = vsel %vm508, %v2637, %v2636
        %v2639 = vrot.slane %v1910, 6
        %v2640 = vsel %vm1850, %v2639, %v2638
        %v2641 = vpack.c.b16 %v2640, %v2640
        %v2643 = vsel %vm1696, %v2641, 0
        %v2646 = vsel %vm1696, %v2571, 0
        %2648 = vmatprep.subr.bf16.mxu0 0
        %2649 = vmatpush1.bf16.xpose.msra.mxu0 0
        %2650 = vmatprep.subr.bf16.mxu0 0
        %2651 = vmatpush1.bf16.xpose.msra.mxu0 0
        %2652 = vmatprep.subr.bf16.mxu0 0
        %2653 = vmatpush1.bf16.xpose.msra.mxu0 0
        %2654 = vmatprep.subr.bf16.mxu0 0
        %2655 = vmatpush1.bf16.xpose.msra.mxu0 0
        %2656 = vmatprep.subr.bf16.mxu0 0
        %2657 = vmatpush1.bf16.xpose.msra.mxu0 0
        %2658 = vmatprep.subr.bf16.mxu0 0
        %2659 = vmatpush1.bf16.xpose.msra.mxu0 0
        %2660 = vmatprep.subr.bf16.mxu0 0
        %2661 = vmatpush1.bf16.xpose.msra.mxu0 0
        %2662 = vmatprep.subr.bf16.mxu0 0
        %2663 = vmatpush1.bf16.xpose.msra.mxu0 %v2646
        %2664 = vmatprep.subr.bf16.mxu0 0
        %2665 = vmatpush2.bf16.xpose.msra.mxu0 0
        %2666 = vmatprep.subr.bf16.mxu0 0
        %2667 = vmatpush2.bf16.xpose.msra.mxu0 0
        %2668 = vmatprep.subr.bf16.mxu0 0
        %2669 = vmatpush2.bf16.xpose.msra.mxu0 0
        %2670 = vmatprep.subr.bf16.mxu0 0
        %2671 = vmatpush2.bf16.xpose.msra.mxu0 0
        %2672 = vmatprep.subr.bf16.mxu0 0
        %2673 = vmatpush2.bf16.xpose.msra.mxu0 0
        %2674 = vmatprep.subr.bf16.mxu0 0
        %2675 = vmatpush2.bf16.xpose.msra.mxu0 0
        %2676 = vmatprep.subr.bf16.mxu0 0
        %2677 = vmatpush2.bf16.xpose.msra.mxu0 0
        %2678 = vmatprep.subr.bf16.mxu0 0
        %2679 = vmatpush2.bf16.xpose.msra.mxu0 0
        %2680 = vmatprep.mubr.bf16.mxu0 0
        %2681 = vmatmul.mubr.bf16.gmra.mxu0 %v2643
        %v2682 = vpop.f32.mrf.mxu0
        %v2683 = vadd.f32 0.0, %v2682
        %v2684 = vpop.f32.mrf.mxu0
        %v2685 = vpop.f32.mrf.mxu0
        %v2686 = vpop.f32.mrf.mxu0
        %2687 = vdwg.mxu0
        %v2688 = vrot.slane %v1974, 3
        %v2689 = vrot.slane %v1975, 2
        %v2690 = vsel %vm308, %v2689, %v2688
        %v2691 = vrot.slane %v1976, 1
        %v2692 = vsel %vm310, %v2691, %v2690
        %v2693 = vsel %vm312, %v1977, %v2692
        %v2694 = vrot.slane %v1978, 7
        %v2695 = vsel %vm508, %v2694, %v2693
        %v2696 = vrot.slane %v1979, 6
        %v2697 = vsel %vm1850, %v2696, %v2695
        %v2698 = vpack.c.b16 %v2697, %v2697
        %v2700 = vsel %vm1696, %v2698, 0
        %v2703 = vsel %vm1696, %v2572, 0
        %2705 = vmatprep.subr.bf16.mxu0 0
        %2706 = vmatpush1.bf16.xpose.msra.mxu0 0
        %2707 = vmatprep.subr.bf16.mxu0 0
        %2708 = vmatpush1.bf16.xpose.msra.mxu0 0
        %2709 = vmatprep.subr.bf16.mxu0 0
        %2710 = vmatpush1.bf16.xpose.msra.mxu0 0
        %2711 = vmatprep.subr.bf16.mxu0 0
        %2712 = vmatpush1.bf16.xpose.msra.mxu0 0
        %2713 = vmatprep.subr.bf16.mxu0 0
        %2714 = vmatpush1.bf16.xpose.msra.mxu0 0
        %2715 = vmatprep.subr.bf16.mxu0 0
        %2716 = vmatpush1.bf16.xpose.msra.mxu0 0
        %2717 = vmatprep.subr.bf16.mxu0 0
        %2718 = vmatpush1.bf16.xpose.msra.mxu0 0
        %2719 = vmatprep.subr.bf16.mxu0 0
        %2720 = vmatpush1.bf16.xpose.msra.mxu0 %v2703
        %2721 = vmatprep.subr.bf16.mxu0 0
        %2722 = vmatpush2.bf16.xpose.msra.mxu0 0
        %2723 = vmatprep.subr.bf16.mxu0 0
        %2724 = vmatpush2.bf16.xpose.msra.mxu0 0
        %2725 = vmatprep.subr.bf16.mxu0 0
        %2726 = vmatpush2.bf16.xpose.msra.mxu0 0
        %2727 = vmatprep.subr.bf16.mxu0 0
        %2728 = vmatpush2.bf16.xpose.msra.mxu0 0
        %2729 = vmatprep.subr.bf16.mxu0 0
        %2730 = vmatpush2.bf16.xpose.msra.mxu0 0
        %2731 = vmatprep.subr.bf16.mxu0 0
        %2732 = vmatpush2.bf16.xpose.msra.mxu0 0
        %2733 = vmatprep.subr.bf16.mxu0 0
        %2734 = vmatpush2.bf16.xpose.msra.mxu0 0
        %2735 = vmatprep.subr.bf16.mxu0 0
        %2736 = vmatpush2.bf16.xpose.msra.mxu0 0
        %2737 = vmatprep.mubr.bf16.mxu0 0
        %2738 = vmatmul.mubr.bf16.gmra.mxu0 %v2700
        %v2739 = vpop.f32.mrf.mxu0
        %v2740 = vadd.f32 0.0, %v2739
        %v2741 = vpop.f32.mrf.mxu0
        %v2742 = vpop.f32.mrf.mxu0
        %v2743 = vpop.f32.mrf.mxu0
        %2744 = vdwg.mxu0
        %v2745 = vrot.slane %v2043, 3
        %v2746 = vrot.slane %v2044, 2
        %v2747 = vsel %vm308, %v2746, %v2745
        %v2748 = vrot.slane %v2045, 1
        %v2749 = vsel %vm310, %v2748, %v2747
        %v2750 = vsel %vm312, %v2046, %v2749
        %v2751 = vrot.slane %v2047, 7
        %v2752 = vsel %vm508, %v2751, %v2750
        %v2753 = vrot.slane %v2048, 6
        %v2754 = vsel %vm1850, %v2753, %v2752
        %v2755 = vpack.c.b16 %v2754, %v2754
        %v2757 = vsel %vm1696, %v2755, 0
        %v2760 = vsel %vm1696, %v2573, 0
        %2762 = vmatprep.subr.bf16.mxu0 0
        %2763 = vmatpush1.bf16.xpose.msra.mxu0 0
        %2764 = vmatprep.subr.bf16.mxu0 0
        %2765 = vmatpush1.bf16.xpose.msra.mxu0 0
        %2766 = vmatprep.subr.bf16.mxu0 0
        %2767 = vmatpush1.bf16.xpose.msra.mxu0 0
        %2768 = vmatprep.subr.bf16.mxu0 0
        %2769 = vmatpush1.bf16.xpose.msra.mxu0 0
        %2770 = vmatprep.subr.bf16.mxu0 0
        %2771 = vmatpush1.bf16.xpose.msra.mxu0 0
        %2772 = vmatprep.subr.bf16.mxu0 0
        %2773 = vmatpush1.bf16.xpose.msra.mxu0 0
        %2774 = vmatprep.subr.bf16.mxu0 0
        %2775 = vmatpush1.bf16.xpose.msra.mxu0 0
        %2776 = vmatprep.subr.bf16.mxu0 0
        %2777 = vmatpush1.bf16.xpose.msra.mxu0 %v2760
        %2778 = vmatprep.subr.bf16.mxu0 0
        %2779 = vmatpush2.bf16.xpose.msra.mxu0 0
        %2780 = vmatprep.subr.bf16.mxu0 0
        %2781 = vmatpush2.bf16.xpose.msra.mxu0 0
        %2782 = vmatprep.subr.bf16.mxu0 0
        %2783 = vmatpush2.bf16.xpose.msra.mxu0 0
        %2784 = vmatprep.subr.bf16.mxu0 0
        %2785 = vmatpush2.bf16.xpose.msra.mxu0 0
        %2786 = vmatprep.subr.bf16.mxu0 0
        %2787 = vmatpush2.bf16.xpose.msra.mxu0 0
        %2788 = vmatprep.subr.bf16.mxu0 0
        %2789 = vmatpush2.bf16.xpose.msra.mxu0 0
        %2790 = vmatprep.subr.bf16.mxu0 0
        %2791 = vmatpush2.bf16.xpose.msra.mxu0 0
        %2792 = vmatprep.subr.bf16.mxu0 0
        %2793 = vmatpush2.bf16.xpose.msra.mxu0 0
        %2794 = vmatprep.mubr.bf16.mxu0 0
        %2795 = vmatmul.mubr.bf16.gmra.mxu0 %v2757
        %v2796 = vpop.f32.mrf.mxu0
        %v2797 = vadd.f32 0.0, %v2796
        %v2798 = vpop.f32.mrf.mxu0
        %v2799 = vpop.f32.mrf.mxu0
        %v2800 = vpop.f32.mrf.mxu0
        %2801 = vdwg.mxu0
        %2806 = vrot.lane.b32.xlu0 %v2162, 16
        %v2807 = vpop.permute.xlu0 %2806
        %2808 = vrot.lane.b32.xlu0 %v2219, 16
        %v2809 = vpop.permute.xlu0 %2808
        %2810 = vrot.lane.b32.xlu0 %v2276, 16
        %v2811 = vpop.permute.xlu0 %2810
        %2812 = vrot.lane.b32.xlu0 %v2333, 16
        %v2813 = vpop.permute.xlu0 %2812
        %2822 = vrot.lane.b32.xlu0 %v2394, 32
        %v2823 = vpop.permute.xlu0 %2822
        %2824 = vrot.lane.b32.xlu0 %v2451, 32
        %v2825 = vpop.permute.xlu0 %2824
        %2826 = vrot.lane.b32.xlu0 %v2508, 32
        %v2827 = vpop.permute.xlu0 %2826
        %2828 = vrot.lane.b32.xlu0 %v2565, 32
        %v2829 = vpop.permute.xlu0 %2828
        %2838 = vrot.lane.b32.xlu0 %v2626, 48
        %v2839 = vpop.permute.xlu0 %2838
        %2840 = vrot.lane.b32.xlu0 %v2683, 48
        %v2841 = vpop.permute.xlu0 %2840
        %2842 = vrot.lane.b32.xlu0 %v2740, 48
        %v2843 = vpop.permute.xlu0 %2842
        %2844 = vrot.lane.b32.xlu0 %v2797, 48
        %v2845 = vpop.permute.xlu0 %2844
        %v2850 = vsel %vm1696, %v1894, %v2807
        %v2851 = vsel %vm1696, %v1963, %v2809
        %v2852 = vsel %vm1696, %v2032, %v2811
        %v2853 = vsel %vm1696, %v2101, %v2813
        %vm2854 = vcmask 261120
        %v2855 = vsel %vm2854, %v2850, %v2823
        %v2856 = vsel %vm2854, %v2851, %v2825
        %v2857 = vsel %vm2854, %v2852, %v2827
        %v2858 = vsel %vm2854, %v2853, %v2829
        %vm2859 = vcmask 392192
        %v2860 = vsel %vm2859, %v2855, %v2839
        %v2861 = vsel %vm2859, %v2856, %v2841
        %v2862 = vsel %vm2859, %v2857, %v2843
        %v2863 = vsel %vm2859, %v2858, %v2845
        %v2868 = vcombine.high %v2860, %v2860
        %v2870 = vunpack.c.l.s4 1983009808
        %v2871 = vunpack.c.0.s8 %v2870
        %v2872 = vlaneseq
        %v2873 = vshrl.u32 %v2872, 7
        %v2874 = vsub.s32 %v2871, %v2873
        %v2875 = vrot.slane %v2860, %v2874
        %v2877 = vunpack.c.l.s4 1983009808
        %v2878 = vunpack.c.0.s8 %v2877
        %v2879 = vlaneseq
        %v2880 = vshrl.u32 %v2879, 7
        %v2881 = vsub.s32 %v2878, %v2880
        %v2882 = vrot.slane %v2868, %v2881
        %v2883 = vcombine.high %v2875, %v2875
        %v2884 = vcombine.high %v2861, %v2861
        %v2886 = vunpack.c.l.s4 1983009808
        %v2887 = vunpack.c.0.s8 %v2886
        %v2888 = vlaneseq
        %v2889 = vshrl.u32 %v2888, 7
        %v2890 = vsub.s32 %v2887, %v2889
        %v2891 = vrot.slane %v2861, %v2890
        %v2893 = vunpack.c.l.s4 1983009808
        %v2894 = vunpack.c.0.s8 %v2893
        %v2895 = vlaneseq
        %v2896 = vshrl.u32 %v2895, 7
        %v2897 = vsub.s32 %v2894, %v2896
        %v2898 = vrot.slane %v2884, %v2897
        %v2899 = vcombine.high %v2891, %v2891
        %v2900 = vcombine.high %v2862, %v2862
        %v2902 = vunpack.c.l.s4 1983009808
        %v2903 = vunpack.c.0.s8 %v2902
        %v2904 = vlaneseq
        %v2905 = vshrl.u32 %v2904, 7
        %v2906 = vsub.s32 %v2903, %v2905
        %v2907 = vrot.slane %v2862, %v2906
        %v2909 = vunpack.c.l.s4 1983009808
        %v2910 = vunpack.c.0.s8 %v2909
        %v2911 = vlaneseq
        %v2912 = vshrl.u32 %v2911, 7
        %v2913 = vsub.s32 %v2910, %v2912
        %v2914 = vrot.slane %v2900, %v2913
        %v2915 = vcombine.high %v2907, %v2907
        %v2916 = vcombine.high %v2863, %v2863
        %v2918 = vunpack.c.l.s4 1983009808
        %v2919 = vunpack.c.0.s8 %v2918
        %v2920 = vlaneseq
        %v2921 = vshrl.u32 %v2920, 7
        %v2922 = vsub.s32 %v2919, %v2921
        %v2923 = vrot.slane %v2863, %v2922
        %v2925 = vunpack.c.l.s4 1983009808
        %v2926 = vunpack.c.0.s8 %v2925
        %v2927 = vlaneseq
        %v2928 = vshrl.u32 %v2927, 7
        %v2929 = vsub.s32 %v2926, %v2928
        %v2930 = vrot.slane %v2916, %v2929
        %v2931 = vcombine.high %v2923, %v2923
        %v2932 = vcombine.low %v2875, %v2883
        %v2933 = vcombine.low %v2882, %v2891
        %v2935 = vunpack.c.l.s4 1983009808
        %v2936 = vunpack.c.0.s8 %v2935
        %v2937 = vlaneseq
        %v2938 = vshrl.u32 %v2937, 7
        %v2939 = vsub.s32 %v2936, %v2938
        %v2940 = vrot.slane %v2932, %v2939
        %v2942 = vunpack.c.l.s4 1983009808
        %v2943 = vunpack.c.0.s8 %v2942
        %v2944 = vlaneseq
        %v2945 = vshrl.u32 %v2944, 7
        %v2946 = vsub.s32 %v2943, %v2945
        %v2947 = vrot.slane %v2933, %v2946
        %v2948 = vcombine.low %v2940, %v2947
        %v2949 = vcombine.low %v2899, %v2898
        %v2950 = vcombine.low %v2907, %v2915
        %v2952 = vunpack.c.l.s4 1983009808
        %v2953 = vunpack.c.0.s8 %v2952
        %v2954 = vlaneseq
        %v2955 = vshrl.u32 %v2954, 7
        %v2956 = vsub.s32 %v2953, %v2955
        %v2957 = vrot.slane %v2949, %v2956
        %v2959 = vunpack.c.l.s4 1983009808
        %v2960 = vunpack.c.0.s8 %v2959
        %v2961 = vlaneseq
        %v2962 = vshrl.u32 %v2961, 7
        %v2963 = vsub.s32 %v2960, %v2962
        %v2964 = vrot.slane %v2950, %v2963
        %v2965 = vcombine.low %v2957, %v2964
        %v2966 = vcombine.low %v2914, %v2923
        %v2967 = vcombine.low %v2931, %v2930
        %v2969 = vunpack.c.l.s4 1983009808
        %v2970 = vunpack.c.0.s8 %v2969
        %v2971 = vlaneseq
        %v2972 = vshrl.u32 %v2971, 7
        %v2973 = vsub.s32 %v2970, %v2972
        %v2974 = vrot.slane %v2966, %v2973
        %v2976 = vunpack.c.l.s4 1983009808
        %v2977 = vunpack.c.0.s8 %v2976
        %v2978 = vlaneseq
        %v2979 = vshrl.u32 %v2978, 7
        %v2980 = vsub.s32 %v2977, %v2979
        %v2981 = vrot.slane %v2967, %v2980
        %v2982 = vcombine.low %v2974, %v2981
        %v2986 = vpack.c.bf16 %v2965, %v2948
        %v2987 = vpack.c.bf16 %v2982, %v2982
        %v2988 = vld [vmem:[#allocation4] sm:$0xf]
        %v2989 = vld [vmem:[#allocation4 + $0x4] sm:$0xf]
        %v2990 = vld [vmem:[#allocation4 + $0x8] sm:$0xf]
        %v2991 = vld [vmem:[#allocation4 + $0xc] sm:$0xf]
        %v2992 = vld [vmem:[#allocation4 + $0x10] sm:$0xf]
        %v2993 = vld [vmem:[#allocation4 + $0x14] sm:$0xf]
        %v2994 = vld [vmem:[#allocation4 + $0x18] sm:$0xf]
        %v2995 = vld [vmem:[#allocation4 + $0x1c] sm:$0xf]
        %v3004 = vunpack.c.l.b16 %v2988
        %v3005 = vunpack.c.l.b16 %v2989
        %v3006 = vunpack.c.l.b16 %v2990
        %v3007 = vunpack.c.l.b16 %v2991
        %v3008 = vunpack.c.l.b16 %v2992
        %v3009 = vunpack.c.l.b16 %v2993
        %v3010 = vunpack.c.l.b16 %v2994
        %v3011 = vunpack.c.l.b16 %v2995
        %v3012 = vpack.c.b16 %v3005, %v3004
        %v3013 = vpack.c.b16 %v3007, %v3006
        %v3014 = vpack.c.b16 %v3009, %v3008
        %v3015 = vpack.c.b16 %v3011, %v3010
        %vm3020 = vcmask 523264
        %v3022 = vsel %vm3020, %v2986, 0
        %v3025 = vsel %vm3020, %v2987, 0
        %3027 = vmatprep.subr.bf16.mxu0 0
        %3028 = vmatpush1.bf16.msra.mxu0 0
        %3029 = vmatprep.subr.bf16.mxu0 0
        %3030 = vmatpush1.bf16.msra.mxu0 0
        %3031 = vmatprep.subr.bf16.mxu0 0
        %3032 = vmatpush1.bf16.msra.mxu0 0
        %3033 = vmatprep.subr.bf16.mxu0 0
        %3034 = vmatpush1.bf16.msra.mxu0 0
        %3035 = vmatprep.subr.bf16.mxu0 0
        %3036 = vmatpush1.bf16.msra.mxu0 %v3015
        %3037 = vmatprep.subr.bf16.mxu0 0
        %3038 = vmatpush1.bf16.msra.mxu0 %v3014
        %3039 = vmatprep.subr.bf16.mxu0 0
        %3040 = vmatpush1.bf16.msra.mxu0 %v3013
        %3041 = vmatprep.subr.bf16.mxu0 0
        %3042 = vmatpush1.bf16.msra.mxu0 %v3012
        %3043 = vmatprep.subr.bf16.mxu0 0
        %3044 = vmatpush2.bf16.msra.mxu0 0
        %3045 = vmatprep.subr.bf16.mxu0 0
        %3046 = vmatpush2.bf16.msra.mxu0 0
        %3047 = vmatprep.subr.bf16.mxu0 0
        %3048 = vmatpush2.bf16.msra.mxu0 0
        %3049 = vmatprep.subr.bf16.mxu0 0
        %3050 = vmatpush2.bf16.msra.mxu0 0
        %3051 = vmatprep.subr.bf16.mxu0 0
        %3052 = vmatpush2.bf16.msra.mxu0 0
        %3053 = vmatprep.subr.bf16.mxu0 0
        %3054 = vmatpush2.bf16.msra.mxu0 0
        %3055 = vmatprep.subr.bf16.mxu0 0
        %3056 = vmatpush2.bf16.msra.mxu0 0
        %3057 = vmatprep.subr.bf16.mxu0 0
        %3058 = vmatpush2.bf16.msra.mxu0 0
        %3059 = vmatprep.mubr.bf16.mxu0 0
        %3060 = vmatmul.mubr.bf16.gmra.mxu0 %v3022
        %v3061 = vpop.f32.mrf.mxu0
        %v3062 = vadd.f32 0.0, %v3061
        %v3063 = vpop.f32.mrf.mxu0
        %v3064 = vpop.f32.mrf.mxu0
        %v3065 = vadd.f32 0.0, %v3064
        %v3066 = vpop.f32.mrf.mxu0
        %3067 = vmatprep.mubr.bf16.mxu0 0
        %3068 = vmatmul.mubr.bf16.gmra.mxu0 %v3025
        %v3069 = vpop.f32.mrf.mxu0
        %v3070 = vadd.f32 0.0, %v3069
        %v3071 = vpop.f32.mrf.mxu0
        %v3072 = vpop.f32.mrf.mxu0
        %v3073 = vpop.f32.mrf.mxu0
        %3074 = vdwg.mxu0
        %v3078 = vcombine.high %v3062, %v3062
        %v3080 = vunpack.c.l.s4 1983009808
        %v3081 = vunpack.c.0.s8 %v3080
        %v3082 = vlaneseq
        %v3083 = vshrl.u32 %v3082, 7
        %v3084 = vsub.s32 %v3081, %v3083
        %v3085 = vrot.slane %v3062, %v3084
        %v3087 = vunpack.c.l.s4 1983009808
        %v3088 = vunpack.c.0.s8 %v3087
        %v3089 = vlaneseq
        %v3090 = vshrl.u32 %v3089, 7
        %v3091 = vsub.s32 %v3088, %v3090
        %v3092 = vrot.slane %v3078, %v3091
        %v3093 = vcombine.high %v3085, %v3085
        %v3094 = vcombine.high %v3092, %v3092
        %v3095 = vcombine.high %v3065, %v3065
        %v3097 = vunpack.c.l.s4 1983009808
        %v3098 = vunpack.c.0.s8 %v3097
        %v3099 = vlaneseq
        %v3100 = vshrl.u32 %v3099, 7
        %v3101 = vsub.s32 %v3098, %v3100
        %v3102 = vrot.slane %v3065, %v3101
        %v3104 = vunpack.c.l.s4 1983009808
        %v3105 = vunpack.c.0.s8 %v3104
        %v3106 = vlaneseq
        %v3107 = vshrl.u32 %v3106, 7
        %v3108 = vsub.s32 %v3105, %v3107
        %v3109 = vrot.slane %v3095, %v3108
        %v3110 = vcombine.high %v3102, %v3102
        %v3111 = vcombine.high %v3109, %v3109
        %v3112 = vcombine.high %v3070, %v3070
        %v3114 = vunpack.c.l.s4 1983009808
        %v3115 = vunpack.c.0.s8 %v3114
        %v3116 = vlaneseq
        %v3117 = vshrl.u32 %v3116, 7
        %v3118 = vsub.s32 %v3115, %v3117
        %v3119 = vrot.slane %v3070, %v3118
        %v3121 = vunpack.c.l.s4 1983009808
        %v3122 = vunpack.c.0.s8 %v3121
        %v3123 = vlaneseq
        %v3124 = vshrl.u32 %v3123, 7
        %v3125 = vsub.s32 %v3122, %v3124
        %v3126 = vrot.slane %v3112, %v3125
        %v3127 = vcombine.high %v3119, %v3119
        %v3128 = vcombine.high %v3126, %v3126
        %v3129 = vcombine.low %v3085, %v3093
        %v3131 = vunpack.c.l.s4 1983009808
        %v3132 = vunpack.c.0.s8 %v3131
        %v3133 = vlaneseq
        %v3134 = vshrl.u32 %v3133, 7
        %v3135 = vsub.s32 %v3132, %v3134
        %v3136 = vrot.slane %v3129, %v3135
        %v3138 = vunpack.c.l.s4 1983009808
        %v3139 = vunpack.c.0.s8 %v3138
        %v3140 = vlaneseq
        %v3141 = vshrl.u32 %v3140, 7
        %v3142 = vsub.s32 %v3139, %v3141
        %v3143 = vrot.slane %v3092, %v3142
        %v3144 = vcombine.low %v3136, %v3143
        %v3145 = vcombine.low %v3094, %v3102
        %v3147 = vunpack.c.l.s4 1983009808
        %v3148 = vunpack.c.0.s8 %v3147
        %v3149 = vlaneseq
        %v3150 = vshrl.u32 %v3149, 7
        %v3151 = vsub.s32 %v3148, %v3150
        %v3152 = vrot.slane %v3145, %v3151
        %v3154 = vunpack.c.l.s4 1983009808
        %v3155 = vunpack.c.0.s8 %v3154
        %v3156 = vlaneseq
        %v3157 = vshrl.u32 %v3156, 7
        %v3158 = vsub.s32 %v3155, %v3157
        %v3159 = vrot.slane %v3110, %v3158
        %v3160 = vcombine.low %v3152, %v3159
        %v3161 = vcombine.low %v3109, %v3111
        %v3163 = vunpack.c.l.s4 1983009808
        %v3164 = vunpack.c.0.s8 %v3163
        %v3165 = vlaneseq
        %v3166 = vshrl.u32 %v3165, 7
        %v3167 = vsub.s32 %v3164, %v3166
        %v3168 = vrot.slane %v3161, %v3167
        %v3170 = vunpack.c.l.s4 1983009808
        %v3171 = vunpack.c.0.s8 %v3170
        %v3172 = vlaneseq
        %v3173 = vshrl.u32 %v3172, 7
        %v3174 = vsub.s32 %v3171, %v3173
        %v3175 = vrot.slane %v3119, %v3174
        %v3176 = vcombine.low %v3168, %v3175
        %v3177 = vcombine.low %v3127, %v3126
        %v3179 = vunpack.c.l.s4 1983009808
        %v3180 = vunpack.c.0.s8 %v3179
        %v3181 = vlaneseq
        %v3182 = vshrl.u32 %v3181, 7
        %v3183 = vsub.s32 %v3180, %v3182
        %v3184 = vrot.slane %v3177, %v3183
        %v3186 = vunpack.c.l.s4 1983009808
        %v3187 = vunpack.c.0.s8 %v3186
        %v3188 = vlaneseq
        %v3189 = vshrl.u32 %v3188, 7
        %v3190 = vsub.s32 %v3187, %v3189
        %v3191 = vrot.slane %v3128, %v3190
        %v3192 = vcombine.low %v3184, %v3191
        %3197 = vst [vmem:[%s234] sm:$0x3f] %v3144
        %3198 = vst [vmem:[%s234 + $0x8] sm:$0x3f] %v3160
        %3199 = vst [vmem:[%s234 + $0x10] sm:$0x3f] %v3176
        %3200 = vst [vmem:[%s234 + $0x18] sm:$0x3f] %v3192
        %s3201 = smul.u32 4, %s19
        %p3202 = scmp.lt.s32.totalorder %s3201, 7
        %s3203 = scalar_select %p3202, %s3201, 7
        %s3204 = smul.addr %s3203, 8
        %s3205 = scalar_lea.vmem %s4, %s3204
        // Predicated region
        $region45: #{tpu_custom_call.1} parent=35 // pred_check
          %p3206 = pneg %p126
        $region46: #{tpu_custom_call.1} parent=35 // pred_check_branch
          %3208 = sbr.rel (%p3206) target = $region48
        $region47: #{tpu_custom_call.1} parent=35 // pred_region
          %s3209 = smul.u32 4, %s19
        $region48: #{tpu_custom_call.1} parent=35 // pred_fallthru
          _
      $region36: #{tpu_custom_call.1} parent=5 // pred_fallthru
        _
      %p3210 = scmp.le.s32.totalorder 2, %s14
      // Predicated region
      $region49: #{tpu_custom_call.1} parent=5 // pred_check
        %p3211 = pneg %p3210
      $region50: #{tpu_custom_call.1} parent=5 // pred_check_branch
        %3213 = sbr.rel (%p3211) target = $region52
      $region51: #{tpu_custom_call.1} parent=5 // pred_region
        %s3214 = ssub.s32 %s14, 2
        // Predicated region
        $region53: #{tpu_custom_call.1} parent=51 // pred_check
          %p3215 = pneg %p132
        $region54: #{tpu_custom_call.1} parent=51 // pred_check_branch
          %3217 = sbr.rel (%p3215) target = $region56
        $region55: #{tpu_custom_call.1} parent=51 // pred_region
          %s3218 = smul.u32 4, %s20
          %p3219 = scmp.lt.s32.totalorder %s3218, 7
          %s3220 = scalar_select %p3219, %s3218, 7
          %s3221 = smul.addr %s3220, 8
          %s3222 = scalar_lea.vmem %s4, %s3221
        $region56: #{tpu_custom_call.1} parent=51 // pred_fallthru
          _
      $region52: #{tpu_custom_call.1} parent=5 // pred_fallthru
        _
    $region6: #{tpu_custom_call.1} parent=1 // loop_footer
      %s18 = sadd.s32 1, %s14
    $region7: #{tpu_custom_call.1} parent=1 // loop_footer_branch
      %13 = sbr.rel target = $region3
    $region8: #{tpu_custom_call.1} parent=1 // loop_exit
      _
    %3223 = vsyncpa [#allocation3], 1
    %s3224 = scalar_lea.sflag [#allocation3], 1
    %3225 = vsyncpa %s3224, 1
    %3226 = vsyncpa [#allocation5], 1

</llo_original>
